<compile_context>
chip_gen: v7x
topology: tpu7x:2x2x1
jax: 0.10.0
libtpu: 0.0.40
codegen_flags: <defaults>
</compile_context>

<pallas_src>
import math
from functools import partial

import jax
import jax.numpy as jnp
from jax.experimental import pallas as pl
from jax.experimental.pallas import tpu as pltpu

# --- model hyperparameters (module defaults need non-empty model_layers) ---
INPUT_DIM = 3
OUTPUT_DIM = 3
TIME_EMBED_DIM = 64
HALF = TIME_EMBED_DIM // 2
MODEL_LAYERS = [32, 32]
TIME_HIDDEN = 128              # hidden size of the time_mlp Linear
LANE = 128
IN_ROWS = 4                    # streamed input rows: [x0, x1, x2, t]
OUT_ROWS = 8                   # output rows (3 real + 5 zero pad)
H1 = MODEL_LAYERS[0]
H2 = MODEL_LAYERS[1]

# --- packed weight-slab layout (feature-major / transposed weights) ---------
# Every section starts on an 8-row boundary; slab is [SLAB_ROWS, 128] float32.
FREQ_ROW = 0                                  # 64 rows: lane0 = freqs (dup), lane1 = phase
WT_ROW = FREQ_ROW + TIME_EMBED_DIM            # 64 : 128 rows: lanes 0..63 = Wt^T, lane 64 = bt
W1X_ROW = WT_ROW + TIME_HIDDEN                # 192: 32 rows: lanes 0..2 = W1[:3]^T, lane 4 = b1
W1T_ROW = W1X_ROW + H1                        # 224: 32 rows: lanes 0..127 = W1[3:]^T
W2_ROW = W1T_ROW + H1                         # 256: 32 rows: lanes 0..31 = W2^T, lane 32 = b2
W3_ROW = W2_ROW + H2                          # 288: 8 rows : lanes 0..31 = W3^T, lane 32 = b3
SLAB_ROWS = W3_ROW + OUT_ROWS                 # 296 rows (296 x 128 x 4B ~= 148 KiB)

DEFAULT_B_TILE = 4096          # batch columns per grid step (multiple of 128)


def _round_up(x, m):
    return (x + m - 1) // m * m


def _denoiser_kernel(xt_ref, w_ref, o_ref):
    """xt_ref: [4, bt] f32 (x^T rows 0..2, t row 3), w_ref: [SLAB_ROWS, 128] f32,
    o_ref: [8, bt] f32 (rows 0..2 real outputs, rows 3..7 zero)."""
    f32 = jnp.float32
    bf16 = jnp.bfloat16
    w = w_ref

    # ---- SinusoidalTimestepEmbed via the phase trick: cos(x) = sin(x + pi/2) ----
    t_row = xt_ref[INPUT_DIM:INPUT_DIM + 1, :]                        # [1, bt]
    freqs = w[FREQ_ROW:FREQ_ROW + TIME_EMBED_DIM, 0:1]                # [64, 1] (duplicated freqs)
    phase = w[FREQ_ROW:FREQ_ROW + TIME_EMBED_DIM, 1:2]                # [64, 1] (0 / pi/2)
    emb = jnp.sin(t_row * freqs + phase)                              # [64, bt] f32

    # ---- time_mlp Linear(64 -> 128) + ReLU:  h_t = relu(Wt^T @ emb + bt) ----
    wt = w[WT_ROW:WT_ROW + TIME_HIDDEN, :TIME_EMBED_DIM].astype(bf16)            # [128, 64]
    bt_b = w[WT_ROW:WT_ROW + TIME_HIDDEN, TIME_EMBED_DIM:TIME_EMBED_DIM + 1]     # [128, 1]
    h_t = jnp.dot(wt, emb.astype(bf16), preferred_element_type=f32) + bt_b
    h_t = jnp.maximum(h_t, 0.0)                                       # [128, bt]

    # ---- net[0]: Linear(3 + 128 -> 32) + ReLU (split x / t_embed matmul) ----
    # x-part is tiny -> f32 outer products on the VPU (exact, no tiny-K matmul).
    x_h = (w[W1X_ROW:W1X_ROW + H1, 0:1] * xt_ref[0:1, :]
           + w[W1X_ROW:W1X_ROW + H1, 1:2] * xt_ref[1:2, :]
           + w[W1X_ROW:W1X_ROW + H1, 2:3] * xt_ref[2:3, :])           # [32, bt]
    b1 = w[W1X_ROW:W1X_ROW + H1, 4:5]                                 # [32, 1]
    w1t = w[W1T_ROW:W1T_ROW + H1, :TIME_HIDDEN].astype(bf16)          # [32, 128]
    h1 = x_h + jnp.dot(w1t, h_t.astype(bf16), preferred_element_type=f32) + b1
    h1 = jnp.maximum(h1, 0.0)                                         # [32, bt]

    # ---- net[2]: Linear(32 -> 32) + ReLU ----
    w2 = w[W2_ROW:W2_ROW + H2, :H1].astype(bf16)                      # [32, 32]
    b2 = w[W2_ROW:W2_ROW + H2, H1:H1 + 1]                             # [32, 1]
    h2 = jnp.maximum(jnp.dot(w2, h1.astype(bf16), preferred_element_type=f32) + b2, 0.0)

    # ---- net[-1]: Linear(32 -> 3) (rows 3..7 zero-padded; lane-dense store) ----
    w3 = w[W3_ROW:W3_ROW + OUT_ROWS, :H2].astype(bf16)                # [8, 32]
    b3 = w[W3_ROW:W3_ROW + OUT_ROWS, H2:H2 + 1]                       # [8, 1]
    out = jnp.dot(w3, h2.astype(bf16), preferred_element_type=f32) + b3
    o_ref[...] = out.astype(o_ref.dtype)                              # [8, bt]


def init_params(key):
    """Parameter init matching the module's layer shapes (weights stored as (in, out))."""
    ks = jax.random.split(key, 4)

    def linear(k, fan_in, fan_out):
        bound = 1.0 / math.sqrt(fan_in)  # torch.nn.Linear default-ish
        kw, kb = jax.random.split(k)
        w = jax.random.uniform(kw, (fan_in, fan_out), jnp.float32, -bound, bound)
        b = jax.random.uniform(kb, (fan_out,), jnp.float32, -bound, bound)
        return w, b

    wt, bt = linear(ks[0], TIME_EMBED_DIM, TIME_HIDDEN)
    w1, b1 = linear(ks[1], INPUT_DIM + TIME_HIDDEN, MODEL_LAYERS[0])
    w2, b2 = linear(ks[2], MODEL_LAYERS[0], MODEL_LAYERS[1])
    w3, b3 = linear(ks[3], MODEL_LAYERS[1], OUTPUT_DIM)
    return dict(wt=wt, bt=bt, w1=w1, b1=b1, w2=w2, b2=b2, w3=w3, b3=b3)


def pack_params(params):
    """Pack transposed weights/biases (+ sinusoidal freqs & phase) into one f32 slab."""
    emb_scale = math.log(10000.0) / (HALF - 1)
    freqs = jnp.exp(jnp.arange(HALF, dtype=jnp.float32) * -emb_scale)
    freqs_dup = jnp.concatenate([freqs, freqs])
    phase = jnp.concatenate([jnp.zeros((HALF,), jnp.float32),
                             jnp.full((HALF,), jnp.pi / 2, jnp.float32)])

    slab = jnp.zeros((SLAB_ROWS, LANE), jnp.float32)
    slab = slab.at[FREQ_ROW:FREQ_ROW + TIME_EMBED_DIM, 0].set(freqs_dup)
    slab = slab.at[FREQ_ROW:FREQ_ROW + TIME_EMBED_DIM, 1].set(phase)
    slab = slab.at[WT_ROW:WT_ROW + TIME_HIDDEN, :TIME_EMBED_DIM].set(params["wt"].T)
    slab = slab.at[WT_ROW:WT_ROW + TIME_HIDDEN, TIME_EMBED_DIM].set(params["bt"])
    slab = slab.at[W1X_ROW:W1X_ROW + H1, :INPUT_DIM].set(params["w1"][:INPUT_DIM].T)
    slab = slab.at[W1X_ROW:W1X_ROW + H1, 4].set(params["b1"])
    slab = slab.at[W1T_ROW:W1T_ROW + H1, :TIME_HIDDEN].set(params["w1"][INPUT_DIM:].T)
    slab = slab.at[W2_ROW:W2_ROW + H2, :H1].set(params["w2"].T)
    slab = slab.at[W2_ROW:W2_ROW + H2, H1].set(params["b2"])
    slab = slab.at[W3_ROW:W3_ROW + OUTPUT_DIM, :H2].set(params["w3"].T)
    slab = slab.at[W3_ROW:W3_ROW + OUTPUT_DIM, H2].set(params["b3"])
    return slab


@partial(jax.jit, static_argnames=("b_tile",))
def simple_denoiser(x_t, t, packed_w, *, b_tile=DEFAULT_B_TILE):
    """x_t: [B, 3], t: [B] (int or float) -> [B, 3] float32 (== module forward)."""
    B = x_t.shape[0]
    # Feature-major streamed input: rows 0..2 = x_t^T, row 3 = t.
    xt = jnp.concatenate(
        [x_t.astype(jnp.float32).T, t.astype(jnp.float32).reshape(1, B)], axis=0)

    # Pad only to the 128-lane granularity of a step (not a full tile multiple),
    # and keep >= 2 grid steps when possible (v7x has two TensorCores).
    B128 = _round_up(B, LANE)
    n_steps = max(pl.cdiv(B128, b_tile), 2 if B128 >= 2 * LANE else 1)
    bt = _round_up(pl.cdiv(B128, n_steps), LANE)
    B_pad = bt * n_steps
    if B_pad != B:
        xt = jnp.pad(xt, ((0, 0), (0, B_pad - B)))

    flops = 2 * B_pad * (TIME_EMBED_DIM * TIME_HIDDEN
                         + (INPUT_DIM + TIME_HIDDEN) * H1
                         + H1 * H2 + H2 * OUTPUT_DIM)
    bytes_accessed = B_pad * (IN_ROWS + OUT_ROWS) * 4 + SLAB_ROWS * LANE * 4
    cost = pl.CostEstimate(flops=flops,
                           transcendentals=B_pad * TIME_EMBED_DIM,
                           bytes_accessed=bytes_accessed)

    out = pl.pallas_call(
        _denoiser_kernel,
        out_shape=jax.ShapeDtypeStruct((OUT_ROWS, B_pad), jnp.float32),
        grid_spec=pltpu.PrefetchScalarGridSpec(
            num_scalar_prefetch=0,
            grid=(n_steps,),
            in_specs=[
                pl.BlockSpec((IN_ROWS, bt), lambda i: (0, i)),       # streamed x_t / t
                pl.BlockSpec((SLAB_ROWS, LANE), lambda i: (0, 0)),   # VMEM-resident weights
            ],
            out_specs=pl.BlockSpec((OUT_ROWS, bt), lambda i: (0, i)),  # lane-dense output
        ),
        compiler_params=pltpu.CompilerParams(dimension_semantics=("parallel",)),
        cost_estimate=cost,
    )(xt, packed_w)

    return out[:OUTPUT_DIM, :B].T


def _reference_f32(x_t, t, params):
    """Pure-JAX f32 reference matching the PyTorch forward."""
    emb_scale = math.log(10000.0) / (HALF - 1)
    freqs = jnp.exp(jnp.arange(HALF, dtype=jnp.float32) * -emb_scale)
    arg = t.astype(jnp.float32)[:, None] * freqs[None, :]
    temb = jnp.concatenate([jnp.sin(arg), jnp.cos(arg)], axis=-1)
    h_t = jax.nn.relu(temb @ params["wt"] + params["bt"])
    h = jnp.concatenate([x_t.astype(jnp.float32), h_t], axis=-1)
    h = jax.nn.relu(h @ params["w1"] + params["b1"])
    h = jax.nn.relu(h @ params["w2"] + params["b2"])
    return h @ params["w3"] + params["b3"]


def _reference_kernel_precision(x_t, t, params):
    """Pure-JAX mirror of the kernel's numerics (phase trick + bf16 matmul operands)."""
    f32, bf16 = jnp.float32, jnp.bfloat16
    emb_scale = math.log(10000.0) / (HALF - 1)
    freqs = jnp.exp(jnp.arange(HALF, dtype=f32) * -emb_scale)
    freqs_dup = jnp.concatenate([freqs, freqs])
    phase = jnp.concatenate([jnp.zeros((HALF,), f32), jnp.full((HALF,), jnp.pi / 2, f32)])
    temb = jnp.sin(t.astype(f32)[:, None] * freqs_dup[None, :] + phase[None, :])
    h_t = jax.nn.relu(jnp.dot(temb.astype(bf16), params["wt"].astype(bf16),
                              preferred_element_type=f32) + params["bt"])
    w1x = params["w1"][:INPUT_DIM]
    x_h = (x_t[:, 0:1].astype(f32) * w1x[0][None, :]
           + x_t[:, 1:2].astype(f32) * w1x[1][None, :]
           + x_t[:, 2:3].astype(f32) * w1x[2][None, :])
    h1 = jax.nn.relu(x_h + jnp.dot(h_t.astype(bf16), params["w1"][INPUT_DIM:].astype(bf16),
                                   preferred_element_type=f32) + params["b1"])
    h2 = jax.nn.relu(jnp.dot(h1.astype(bf16), params["w2"].astype(bf16),
                             preferred_element_type=f32) + params["b2"])
    return jnp.dot(h2.astype(bf16), params["w3"].astype(bf16),
                   preferred_element_type=f32) + params["b3"]


if __name__ == "__main__":
    key = jax.random.PRNGKey(0)
    k_param, k_data = jax.random.split(key)

    params = init_params(k_param)
    packed = pack_params(params)

    # B=8 (single grid step) and B=300 (exercises lane padding + a 2-step grid).
    for B in (8, 300):
        kx, kt = jax.random.split(jax.random.fold_in(k_data, B))
        x_t = jax.random.normal(kx, (B, INPUT_DIM), dtype=jnp.float32)
        t = jax.random.randint(kt, (B,), 0, 1000)

        out = jax.block_until_ready(simple_denoiser(x_t, t, packed))
        assert out.shape == (B, OUTPUT_DIM) and out.dtype == jnp.float32
        assert bool(jnp.isfinite(out).all())

        # Tight check against a pure-JAX mirror of the kernel's exact numerics.
        ref_k = _reference_kernel_precision(x_t, t, params)
        err_k = float(jnp.max(jnp.abs(out - ref_k)))
        assert err_k < 2e-3, f"mismatch vs kernel-precision reference: {err_k}"

        # Loose check against the full-f32 module forward (bf16 matmul operands).
        ref = _reference_f32(x_t, t, params)
        err = float(jnp.max(jnp.abs(out - ref)))
        assert err < 6e-2, f"mismatch vs f32 reference: {err}"

    print("KERNEL_OK")
</pallas_src>

<mosaic_0001>
module attributes {stable_mosaic.version = 11 : i64} {
  func.func @_denoiser_kernel(%arg0: i32, %arg1: memref<4x128xf32, #tpu.memory_space<vmem>>, %arg2: memref<296x128xf32, #tpu.memory_space<vmem>>, %arg3: memref<8x128xf32, #tpu.memory_space<vmem>>) attributes {dimension_semantics = [#tpu.dimension_semantics<parallel>], iteration_bounds = array<i64: 1>, scalar_prefetch = 0 : i64, scratch_operands = 0 : i64, tpu.core_type = #tpu.core_type<tc>, window_params = [{transform_indices = @transform_0, window_bounds = array<i64: 4, 128>}, {pipeline_mode = #tpu.pipeline_mode<synchronous>, transform_indices = @transform_1, window_bounds = array<i64: 296, 128>}, {transform_indices = @transform_2, window_bounds = array<i64: 8, 128>}]} {
    %c3 = arith.constant 3 : index
    %c0 = arith.constant 0 : index
    %0 = vector.load %arg1[%c3, %c0] : memref<4x128xf32, #tpu.memory_space<vmem>>, vector<1x128xf32>
    %c0_0 = arith.constant 0 : index
    %c0_1 = arith.constant 0 : index
    %1 = vector.load %arg2[%c0_0, %c0_1] : memref<296x128xf32, #tpu.memory_space<vmem>>, vector<64x1xf32>
    %c0_2 = arith.constant 0 : index
    %c1 = arith.constant 1 : index
    %2 = vector.load %arg2[%c0_2, %c1] : memref<296x128xf32, #tpu.memory_space<vmem>>, vector<64x1xf32>
    %3 = vector.broadcast %0 : vector<1x128xf32> to vector<64x128xf32>
    %4 = vector.broadcast %1 : vector<64x1xf32> to vector<64x128xf32>
    %5 = arith.mulf %3, %4 : vector<64x128xf32>
    %6 = vector.broadcast %2 : vector<64x1xf32> to vector<64x128xf32>
    %7 = arith.addf %5, %6 : vector<64x128xf32>
    %8 = math.sin %7 : vector<64x128xf32>
    %c64 = arith.constant 64 : index
    %c0_3 = arith.constant 0 : index
    %9 = vector.load %arg2[%c64, %c0_3] : memref<296x128xf32, #tpu.memory_space<vmem>>, vector<128x64xf32>
    %10 = arith.truncf %9 : vector<128x64xf32> to vector<128x64xbf16>
    %c64_4 = arith.constant 64 : index
    %c64_5 = arith.constant 64 : index
    %11 = vector.load %arg2[%c64_4, %c64_5] : memref<296x128xf32, #tpu.memory_space<vmem>>, vector<128x1xf32>
    %12 = arith.truncf %8 : vector<64x128xf32> to vector<64x128xbf16>
    %cst = arith.constant dense<0.000000e+00> : vector<128x128xf32>
    %13 = tpu.matmul %10, %12, %cst {dimension_numbers = #tpu.dot_dimension_numbers<[1], [0], [0], [1], [0, 0, 1, 1], [], []>} : vector<128x64xbf16>, vector<64x128xbf16>, vector<128x128xf32> -> vector<128x128xf32>
    %14 = vector.broadcast %11 : vector<128x1xf32> to vector<128x128xf32>
    %15 = arith.addf %13, %14 : vector<128x128xf32>
    %cst_6 = arith.constant 0.000000e+00 : f32
    %16 = vector.broadcast %cst_6 : f32 to vector<128x128xf32>
    %17 = arith.maximumf %15, %16 : vector<128x128xf32>
    %c192 = arith.constant 192 : index
    %c0_7 = arith.constant 0 : index
    %18 = vector.load %arg2[%c192, %c0_7] : memref<296x128xf32, #tpu.memory_space<vmem>>, vector<32x1xf32>
    %c0_8 = arith.constant 0 : index
    %c0_9 = arith.constant 0 : index
    %19 = vector.load %arg1[%c0_8, %c0_9] : memref<4x128xf32, #tpu.memory_space<vmem>>, vector<1x128xf32>
    %20 = vector.broadcast %18 : vector<32x1xf32> to vector<32x128xf32>
    %21 = vector.broadcast %19 : vector<1x128xf32> to vector<32x128xf32>
    %22 = arith.mulf %20, %21 : vector<32x128xf32>
    %c192_10 = arith.constant 192 : index
    %c1_11 = arith.constant 1 : index
    %23 = vector.load %arg2[%c192_10, %c1_11] : memref<296x128xf32, #tpu.memory_space<vmem>>, vector<32x1xf32>
    %c1_12 = arith.constant 1 : index
    %c0_13 = arith.constant 0 : index
    %24 = vector.load %arg1[%c1_12, %c0_13] : memref<4x128xf32, #tpu.memory_space<vmem>>, vector<1x128xf32>
    %25 = vector.broadcast %23 : vector<32x1xf32> to vector<32x128xf32>
    %26 = vector.broadcast %24 : vector<1x128xf32> to vector<32x128xf32>
    %27 = arith.mulf %25, %26 : vector<32x128xf32>
    %28 = arith.addf %22, %27 : vector<32x128xf32>
    %c192_14 = arith.constant 192 : index
    %c2 = arith.constant 2 : index
    %29 = vector.load %arg2[%c192_14, %c2] : memref<296x128xf32, #tpu.memory_space<vmem>>, vector<32x1xf32>
    %c2_15 = arith.constant 2 : index
    %c0_16 = arith.constant 0 : index
    %30 = vector.load %arg1[%c2_15, %c0_16] : memref<4x128xf32, #tpu.memory_space<vmem>>, vector<1x128xf32>
    %31 = vector.broadcast %29 : vector<32x1xf32> to vector<32x128xf32>
    %32 = vector.broadcast %30 : vector<1x128xf32> to vector<32x128xf32>
    %33 = arith.mulf %31, %32 : vector<32x128xf32>
    %34 = arith.addf %28, %33 : vector<32x128xf32>
    %c192_17 = arith.constant 192 : index
    %c4 = arith.constant 4 : index
    %35 = vector.load %arg2[%c192_17, %c4] : memref<296x128xf32, #tpu.memory_space<vmem>>, vector<32x1xf32>
    %c224 = arith.constant 224 : index
    %c0_18 = arith.constant 0 : index
    %36 = vector.load %arg2[%c224, %c0_18] : memref<296x128xf32, #tpu.memory_space<vmem>>, vector<32x128xf32>
    %37 = arith.truncf %36 : vector<32x128xf32> to vector<32x128xbf16>
    %38 = arith.truncf %17 : vector<128x128xf32> to vector<128x128xbf16>
    %cst_19 = arith.constant dense<0.000000e+00> : vector<32x128xf32>
    %39 = tpu.matmul %37, %38, %cst_19 {dimension_numbers = #tpu.dot_dimension_numbers<[1], [0], [0], [1], [0, 0, 1, 1], [], []>} : vector<32x128xbf16>, vector<128x128xbf16>, vector<32x128xf32> -> vector<32x128xf32>
    %40 = arith.addf %34, %39 : vector<32x128xf32>
    %41 = vector.broadcast %35 : vector<32x1xf32> to vector<32x128xf32>
    %42 = arith.addf %40, %41 : vector<32x128xf32>
    %cst_20 = arith.constant 0.000000e+00 : f32
    %43 = vector.broadcast %cst_20 : f32 to vector<32x128xf32>
    %44 = arith.maximumf %42, %43 : vector<32x128xf32>
    %c256 = arith.constant 256 : index
    %c0_21 = arith.constant 0 : index
    %45 = vector.load %arg2[%c256, %c0_21] : memref<296x128xf32, #tpu.memory_space<vmem>>, vector<32x32xf32>
    %46 = arith.truncf %45 : vector<32x32xf32> to vector<32x32xbf16>
    %c256_22 = arith.constant 256 : index
    %c32 = arith.constant 32 : index
    %47 = vector.load %arg2[%c256_22, %c32] : memref<296x128xf32, #tpu.memory_space<vmem>>, vector<32x1xf32>
    %48 = arith.truncf %44 : vector<32x128xf32> to vector<32x128xbf16>
    %cst_23 = arith.constant dense<0.000000e+00> : vector<32x128xf32>
    %49 = tpu.matmul %46, %48, %cst_23 {dimension_numbers = #tpu.dot_dimension_numbers<[1], [0], [0], [1], [0, 0, 1, 1], [], []>} : vector<32x32xbf16>, vector<32x128xbf16>, vector<32x128xf32> -> vector<32x128xf32>
    %50 = vector.broadcast %47 : vector<32x1xf32> to vector<32x128xf32>
    %51 = arith.addf %49, %50 : vector<32x128xf32>
    %cst_24 = arith.constant 0.000000e+00 : f32
    %52 = vector.broadcast %cst_24 : f32 to vector<32x128xf32>
    %53 = arith.maximumf %51, %52 : vector<32x128xf32>
    %c288 = arith.constant 288 : index
    %c0_25 = arith.constant 0 : index
    %54 = vector.load %arg2[%c288, %c0_25] : memref<296x128xf32, #tpu.memory_space<vmem>>, vector<8x32xf32>
    %55 = arith.truncf %54 : vector<8x32xf32> to vector<8x32xbf16>
    %c288_26 = arith.constant 288 : index
    %c32_27 = arith.constant 32 : index
    %56 = vector.load %arg2[%c288_26, %c32_27] : memref<296x128xf32, #tpu.memory_space<vmem>>, vector<8x1xf32>
    %57 = arith.truncf %53 : vector<32x128xf32> to vector<32x128xbf16>
    %cst_28 = arith.constant dense<0.000000e+00> : vector<8x128xf32>
    %58 = tpu.matmul %55, %57, %cst_28 {dimension_numbers = #tpu.dot_dimension_numbers<[1], [0], [0], [1], [0, 0, 1, 1], [], []>} : vector<8x32xbf16>, vector<32x128xbf16>, vector<8x128xf32> -> vector<8x128xf32>
    %59 = vector.broadcast %56 : vector<8x1xf32> to vector<8x128xf32>
    %60 = arith.addf %58, %59 : vector<8x128xf32>
    %c0_29 = arith.constant 0 : index
    %c0_30 = arith.constant 0 : index
    %61 = vector.load %arg3[%c0_29, %c0_30] : memref<8x128xf32, #tpu.memory_space<vmem>>, vector<8x128xf32>
    tpu.vector_store %arg3[%c0_29, %c0_30], %60 {strides = array<i32>} : memref<8x128xf32, #tpu.memory_space<vmem>>, vector<8x128xf32>,
    return
  }
  func.func @transform_0(%arg0: i32) -> (i32, i32) {
    %c0_i32 = arith.constant 0 : i32
    %c0_i32_0 = arith.constant 0 : i32
    return %c0_i32, %arg0 : i32, i32
  }
  func.func @transform_1(%arg0: i32) -> (i32, i32) {
    %c0_i32 = arith.constant 0 : i32
    %c0_i32_0 = arith.constant 0 : i32
    %c0_i32_1 = arith.constant 0 : i32
    return %c0_i32, %c0_i32_0 : i32, i32
  }
  func.func @transform_2(%arg0: i32) -> (i32, i32) {
    %c0_i32 = arith.constant 0 : i32
    %c0_i32_0 = arith.constant 0 : i32
    return %c0_i32, %arg0 : i32, i32
  }
}

</mosaic_0001>

<llo_original>
// kernel: simple_denoiser.1
$region0: #{simple_denoiser.1}
  #allocation0 [shape = 'u32[]', space=smem, size = 0x4, offset = 0x4, fixed_abs, tag = 'smem constant byte address 0x4 - core index']
  #allocation1 [shape = 'u32[144,128]{1,0:T(1,128)}', space=vmem, size = 0x12000, scoped, tag = 'internal scratch']
  %s0 = inlined_call_operand.vmem [shape: f32[4,128], index: 0, kind: input, shape index: {}]
  %s1 = inlined_call_operand.hbm [shape: f32[296,128], index: 1, kind: input, shape index: {}]
  %s2 = inlined_call_operand.vmem [shape: f32[8,128], index: 2, kind: output, shape index: {}]
  %s3 = sld [smem:[#allocation0]]
  $region22: #{simple_denoiser.1} parent=0
    _
  %s5 = ssub.s32 1, %s3
  %s6 = scalar_select 0, %s5, %s3
  $region1: #{simple_denoiser.1} parent=0
    #allocation2 [shape = 'u8[151552]{0}', space=vmem, size = 0x25000, scoped, tag = 'input window, operand 1, single buffered']
    #allocation3 [shape = 's32[1]{0}', space=sflag, size = 0x4, scoped, tag = 'scoped memory for simple_denoiser.1']
    %7 = vsyncpa [#allocation3], 0
    // Predicated region
    $region2: #{simple_denoiser.1} parent=1 // pred_check
      _
    $region3: #{simple_denoiser.1} parent=1 // pred_check_branch
      %9 = sbr.rel (0) target = $region5
    $region4: #{simple_denoiser.1} parent=1 // pred_region
      _
    $region5: #{simple_denoiser.1} parent=1 // pred_fallthru
      _
    // Predicated region
    $region6: #{simple_denoiser.1} parent=1 // pred_check
      _
    $region7: #{simple_denoiser.1} parent=1 // pred_check_branch
      %11 = sbr.rel (0) target = $region9
    $region8: #{simple_denoiser.1} parent=1 // pred_region
      %s13 = ssub.s32 4736, 4736
      %14 = vsyncadd [#allocation3], %s13
      %s15 = sshll.u32 [#allocation2], 4
      %s16 = int_to_ptr.vmem [resolvable:$true] %s15
      %21 = dma.hbm_to_vmem [thread:$0]  %s1, 4736, %s16, [#allocation3], 128, 128, 8
    $region9: #{simple_denoiser.1} parent=1 // pred_fallthru
      _
    // Predicated region
    $region10: #{simple_denoiser.1} parent=1 // pred_check
      _
    $region11: #{simple_denoiser.1} parent=1 // pred_check_branch
      %23 = sbr.rel (0) target = $region13
    $region12: #{simple_denoiser.1} parent=1 // pred_region
      %24 = dma.done [#allocation3], 4736
    $region13: #{simple_denoiser.1} parent=1 // pred_fallthru
      _
    %v26 = vld [vmem:[%s0 + $0x3] sm:$0x1]
    %v27 = vld [vmem:[#allocation2] sm:$0xff]
    %v28 = vld [vmem:[#allocation2 + $0x8] sm:$0xff]
    %v29 = vld [vmem:[#allocation2 + $0x10] sm:$0xff]
    %v30 = vld [vmem:[#allocation2 + $0x18] sm:$0xff]
    %v31 = vld [vmem:[#allocation2 + $0x20] sm:$0xff]
    %v32 = vld [vmem:[#allocation2 + $0x28] sm:$0xff]
    %v33 = vld [vmem:[#allocation2 + $0x30] sm:$0xff]
    %v34 = vld [vmem:[#allocation2 + $0x38] sm:$0xff]
    %v35 = vlaneseq
    %v36 = vshrl.u32 %v35, 7
    %v37 = vsub.s32 0, %v36
    %v38 = vrot.slane %v26, %v37
    %40 = vset.pattern.permute.xlu0 0
    %41 = vperm.xlu0 %40, %v27
    %v42 = vpop.permute.xlu0 %41
    %45 = vset.pattern.permute.xlu0 0
    %46 = vperm.xlu0 %45, %v28
    %v47 = vpop.permute.xlu0 %46
    %50 = vset.pattern.permute.xlu0 0
    %51 = vperm.xlu0 %50, %v29
    %v52 = vpop.permute.xlu0 %51
    %55 = vset.pattern.permute.xlu0 0
    %56 = vperm.xlu0 %55, %v30
    %v57 = vpop.permute.xlu0 %56
    %60 = vset.pattern.permute.xlu0 0
    %61 = vperm.xlu0 %60, %v31
    %v62 = vpop.permute.xlu0 %61
    %65 = vset.pattern.permute.xlu0 0
    %66 = vperm.xlu0 %65, %v32
    %v67 = vpop.permute.xlu0 %66
    %70 = vset.pattern.permute.xlu0 0
    %71 = vperm.xlu0 %70, %v33
    %v72 = vpop.permute.xlu0 %71
    %75 = vset.pattern.permute.xlu0 0
    %76 = vperm.xlu0 %75, %v34
    %v77 = vpop.permute.xlu0 %76
    %v79 = vmul.f32 %v38, %v42
    %v80 = vmul.f32 %v38, %v47
    %v81 = vmul.f32 %v38, %v52
    %v82 = vmul.f32 %v38, %v57
    %v83 = vmul.f32 %v38, %v62
    %v84 = vmul.f32 %v38, %v67
    %v85 = vmul.f32 %v38, %v72
    %v86 = vmul.f32 %v38, %v77
    %87 = vset.pattern.permute.xlu0 1
    %88 = vperm.xlu0 %87, %v27
    %v89 = vpop.permute.xlu0 %88
    %91 = vset.pattern.permute.xlu0 1
    %92 = vperm.xlu0 %91, %v28
    %v93 = vpop.permute.xlu0 %92
    %95 = vset.pattern.permute.xlu0 1
    %96 = vperm.xlu0 %95, %v29
    %v97 = vpop.permute.xlu0 %96
    %99 = vset.pattern.permute.xlu0 1
    %100 = vperm.xlu0 %99, %v30
    %v101 = vpop.permute.xlu0 %100
    %103 = vset.pattern.permute.xlu0 1
    %104 = vperm.xlu0 %103, %v31
    %v105 = vpop.permute.xlu0 %104
    %107 = vset.pattern.permute.xlu0 1
    %108 = vperm.xlu0 %107, %v32
    %v109 = vpop.permute.xlu0 %108
    %111 = vset.pattern.permute.xlu0 1
    %112 = vperm.xlu0 %111, %v33
    %v113 = vpop.permute.xlu0 %112
    %115 = vset.pattern.permute.xlu0 1
    %116 = vperm.xlu0 %115, %v34
    %v117 = vpop.permute.xlu0 %116
    %v119 = vadd.f32 %v79, %v89
    %v120 = vadd.f32 %v80, %v93
    %v121 = vadd.f32 %v81, %v97
    %v122 = vadd.f32 %v82, %v101
    %v123 = vadd.f32 %v83, %v105
    %v124 = vadd.f32 %v84, %v109
    %v125 = vadd.f32 %v85, %v113
    %v126 = vadd.f32 %v86, %v117
    %v127 = vand.u32 2147483647, %v119
    %vm128 = vcmp.le.f32.partialorder %v127, 0.7853982
    %vm129 = vcmp.lt.s32.totalorder %v119, 0
    %v130 = vand.u32 %v119, 2139095040
    %v131 = vshrl.u32 %v130, 23
    %v132 = vsub.s32 %v131, 127
    %v133 = vand.u32 2147483647, %v119
    %v134 = vand.u32 %v133, 8388607
    %v135 = vor.u32 %v134, 8388608
    %v136 = vsub.s32 0, %v135
    %v137 = vadd.s32 %v132, 1
    %vm138 = vcmp.gt.s32.totalorder %v137, 0
    %v139 = vsel %vm138, %v137, 0
    %v140 = vshrl.u32 %v139, 5
    %v141 = vand.u32 %v139, 31
    %v142 = vsub.s32 32, %v141
    %v143 = vshrl.u32 683565275, %v142
    %v144 = vshll.u32 683565275, %v141
    %v145 = vshrl.u32 2475754826, %v142
    %v146 = vor.u32 %v144, %v145
    %v147 = vshll.u32 2475754826, %v141
    %v148 = vshrl.u32 2131351028, %v142
    %v149 = vor.u32 %v147, %v148
    %v150 = vshll.u32 2131351028, %v141
    %v151 = vshrl.u32 2102212464, %v142
    %v152 = vor.u32 %v150, %v151
    %v153 = vshll.u32 2102212464, %v141
    %v154 = vshrl.u32 920167782, %v142
    %v155 = vor.u32 %v153, %v154
    %v156 = vshll.u32 920167782, %v141
    %v157 = vshrl.u32 1326507024, %v142
    %v158 = vor.u32 %v156, %v157
    %vm159 = vcmp.lt.s32.totalorder %v140, 1
    %vm160 = vcmp.lt.s32.totalorder %v140, 2
    %vm161 = vcmp.lt.s32.totalorder %v140, 3
    %vm162 = vcmp.lt.s32.totalorder %v140, 4
    %v163 = vsel %vm159, %v143, %v146
    %v164 = vsel %vm162, %v152, 2102212464
    %v165 = vsel %vm161, %v149, %v164
    %v166 = vsel %vm160, %v163, %v165
    %v167 = vsel %vm159, %v146, %v149
    %v168 = vsel %vm162, %v155, 920167782
    %v169 = vsel %vm161, %v152, %v168
    %v170 = vsel %vm160, %v167, %v169
    %v171 = vsel %vm159, %v149, %v152
    %v172 = vsel %vm162, %v158, 1326507024
    %v173 = vsel %vm161, %v155, %v172
    %v174 = vsel %vm160, %v171, %v173
    %v175 = vshll.u32 %v135, 8
    %v176 = vmul.u32.u64.compose %v175, %v174
    %v177 = vextract.low.u32 %v176
    %v178 = vextract.high.u32 %v176
    %v179 = vmul.u32.u64.compose %v175, %v170
    %v180 = vextract.low.u32 %v179
    %v181 = vextract.high.u32 %v179
    %v182 = vmul.u32 %v175, %v166
    %v183 = vadd.s32 %v178, %v180
    %vm184 = vc.u32 %v178, %v180
    %v185 = vadd.s32 %v181, 1
    %v186 = vsel %vm184, %v185, %v181
    %v187 = vadd.s32 %v182, %v186
    %v188 = vadd.s32 %v187, 536870912
    %v189 = vshrl.u32 %v188, 30
    %v190 = vshll.u32 %v189, 30
    %v191 = vsub.s32 %v187, %v190
    %vm192 = vcmp.lt.s32.totalorder %v191, 0
    %v193 = vsub.s32 0, %v191
    %v194 = vsel %vm192, %v193, %v191
    %v195 = vclz %v194
    %v196 = vsub.s32 %v195, 2
    %vm197 = vcmp.gt.s32.totalorder 0, %v196
    %v198 = vsel %vm197, 0, %v196
    %v199 = vsub.s32 32, %v198
    %v200 = vshll.u32 %v191, %v198
    %v201 = vshrl.u32 %v183, %v199
    %v202 = vor.u32 %v200, %v201
    %v203 = vsub.s32 4294967266, %v198
    %v204 = vadd.s32 %v203, 127
    %v205 = vshll.u32 %v204, 23
    %v206 = vor.u32 4788187, %v205
    %v207 = vand.u32 2147483647, %v206
    %v209 = vcvt.s32.f32 %v202
    %v210 = vmul.f32 %v209, %v207
    %v211 = vxor.u32 %v210, 2147483648
    %v212 = vsel %vm129, %v211, %v210
    %v213 = vsub.s32 4, %v189
    %v214 = vsel %vm129, %v213, %v189
    %v215 = vsel %vm128, %v119, %v212
    %v216 = vsel %vm128, 0, %v214
    %v217 = vcosq.f32.pop %v215
    %v218 = vsinq.f32.pop %v215
    %vm219 = vweird.f32 %v119
    %v220 = vadd.s32 %v216, 3
    %v221 = vand.u32 %v220, 3
    %vm222 = vcmp.lt.s32.totalorder %v221, 2
    %vm223 = vcmp.eq.s32.totalorder %v221, 0
    %v224 = vxor.u32 %v218, 2147483648
    %v225 = vsel %vm223, %v217, %v224
    %vm226 = vcmp.eq.s32.totalorder %v221, 2
    %v227 = vxor.u32 %v217, 2147483648
    %v228 = vsel %vm226, %v227, %v218
    %v229 = vsel %vm222, %v225, %v228
    %v230 = vsel %vm219, nan, %v229
    %v231 = vand.u32 2147483647, %v120
    %vm232 = vcmp.le.f32.partialorder %v231, 0.7853982
    %vm233 = vcmp.lt.s32.totalorder %v120, 0
    %v234 = vand.u32 %v120, 2139095040
    %v235 = vshrl.u32 %v234, 23
    %v236 = vsub.s32 %v235, 127
    %v237 = vand.u32 2147483647, %v120
    %v238 = vand.u32 %v237, 8388607
    %v239 = vor.u32 %v238, 8388608
    %v240 = vsub.s32 0, %v239
    %v241 = vadd.s32 %v236, 1
    %vm242 = vcmp.gt.s32.totalorder %v241, 0
    %v243 = vsel %vm242, %v241, 0
    %v244 = vshrl.u32 %v243, 5
    %v245 = vand.u32 %v243, 31
    %v246 = vsub.s32 32, %v245
    %v247 = vshrl.u32 683565275, %v246
    %v248 = vshll.u32 683565275, %v245
    %v249 = vshrl.u32 2475754826, %v246
    %v250 = vor.u32 %v248, %v249
    %v251 = vshll.u32 2475754826, %v245
    %v252 = vshrl.u32 2131351028, %v246
    %v253 = vor.u32 %v251, %v252
    %v254 = vshll.u32 2131351028, %v245
    %v255 = vshrl.u32 2102212464, %v246
    %v256 = vor.u32 %v254, %v255
    %v257 = vshll.u32 2102212464, %v245
    %v258 = vshrl.u32 920167782, %v246
    %v259 = vor.u32 %v257, %v258
    %v260 = vshll.u32 920167782, %v245
    %v261 = vshrl.u32 1326507024, %v246
    %v262 = vor.u32 %v260, %v261
    %vm263 = vcmp.lt.s32.totalorder %v244, 1
    %vm264 = vcmp.lt.s32.totalorder %v244, 2
    %vm265 = vcmp.lt.s32.totalorder %v244, 3
    %vm266 = vcmp.lt.s32.totalorder %v244, 4
    %v267 = vsel %vm263, %v247, %v250
    %v268 = vsel %vm266, %v256, 2102212464
    %v269 = vsel %vm265, %v253, %v268
    %v270 = vsel %vm264, %v267, %v269
    %v271 = vsel %vm263, %v250, %v253
    %v272 = vsel %vm266, %v259, 920167782
    %v273 = vsel %vm265, %v256, %v272
    %v274 = vsel %vm264, %v271, %v273
    %v275 = vsel %vm263, %v253, %v256
    %v276 = vsel %vm266, %v262, 1326507024
    %v277 = vsel %vm265, %v259, %v276
    %v278 = vsel %vm264, %v275, %v277
    %v279 = vshll.u32 %v239, 8
    %v280 = vmul.u32.u64.compose %v279, %v278
    %v281 = vextract.low.u32 %v280
    %v282 = vextract.high.u32 %v280
    %v283 = vmul.u32.u64.compose %v279, %v274
    %v284 = vextract.low.u32 %v283
    %v285 = vextract.high.u32 %v283
    %v286 = vmul.u32 %v279, %v270
    %v287 = vadd.s32 %v282, %v284
    %vm288 = vc.u32 %v282, %v284
    %v289 = vadd.s32 %v285, 1
    %v290 = vsel %vm288, %v289, %v285
    %v291 = vadd.s32 %v286, %v290
    %v292 = vadd.s32 %v291, 536870912
    %v293 = vshrl.u32 %v292, 30
    %v294 = vshll.u32 %v293, 30
    %v295 = vsub.s32 %v291, %v294
    %vm296 = vcmp.lt.s32.totalorder %v295, 0
    %v297 = vsub.s32 0, %v295
    %v298 = vsel %vm296, %v297, %v295
    %v299 = vclz %v298
    %v300 = vsub.s32 %v299, 2
    %vm301 = vcmp.gt.s32.totalorder 0, %v300
    %v302 = vsel %vm301, 0, %v300
    %v303 = vsub.s32 32, %v302
    %v304 = vshll.u32 %v295, %v302
    %v305 = vshrl.u32 %v287, %v303
    %v306 = vor.u32 %v304, %v305
    %v307 = vsub.s32 4294967266, %v302
    %v308 = vadd.s32 %v307, 127
    %v309 = vshll.u32 %v308, 23
    %v310 = vor.u32 4788187, %v309
    %v311 = vand.u32 2147483647, %v310
    %v313 = vcvt.s32.f32 %v306
    %v314 = vmul.f32 %v313, %v311
    %v315 = vxor.u32 %v314, 2147483648
    %v316 = vsel %vm233, %v315, %v314
    %v317 = vsub.s32 4, %v293
    %v318 = vsel %vm233, %v317, %v293
    %v319 = vsel %vm232, %v120, %v316
    %v320 = vsel %vm232, 0, %v318
    %v321 = vcosq.f32.pop %v319
    %v322 = vsinq.f32.pop %v319
    %vm323 = vweird.f32 %v120
    %v324 = vadd.s32 %v320, 3
    %v325 = vand.u32 %v324, 3
    %vm326 = vcmp.lt.s32.totalorder %v325, 2
    %vm327 = vcmp.eq.s32.totalorder %v325, 0
    %v328 = vxor.u32 %v322, 2147483648
    %v329 = vsel %vm327, %v321, %v328
    %vm330 = vcmp.eq.s32.totalorder %v325, 2
    %v331 = vxor.u32 %v321, 2147483648
    %v332 = vsel %vm330, %v331, %v322
    %v333 = vsel %vm326, %v329, %v332
    %v334 = vsel %vm323, nan, %v333
    %v335 = vand.u32 2147483647, %v121
    %vm336 = vcmp.le.f32.partialorder %v335, 0.7853982
    %vm337 = vcmp.lt.s32.totalorder %v121, 0
    %v338 = vand.u32 %v121, 2139095040
    %v339 = vshrl.u32 %v338, 23
    %v340 = vsub.s32 %v339, 127
    %v341 = vand.u32 2147483647, %v121
    %v342 = vand.u32 %v341, 8388607
    %v343 = vor.u32 %v342, 8388608
    %v344 = vsub.s32 0, %v343
    %v345 = vadd.s32 %v340, 1
    %vm346 = vcmp.gt.s32.totalorder %v345, 0
    %v347 = vsel %vm346, %v345, 0
    %v348 = vshrl.u32 %v347, 5
    %v349 = vand.u32 %v347, 31
    %v350 = vsub.s32 32, %v349
    %v351 = vshrl.u32 683565275, %v350
    %v352 = vshll.u32 683565275, %v349
    %v353 = vshrl.u32 2475754826, %v350
    %v354 = vor.u32 %v352, %v353
    %v355 = vshll.u32 2475754826, %v349
    %v356 = vshrl.u32 2131351028, %v350
    %v357 = vor.u32 %v355, %v356
    %v358 = vshll.u32 2131351028, %v349
    %v359 = vshrl.u32 2102212464, %v350
    %v360 = vor.u32 %v358, %v359
    %v361 = vshll.u32 2102212464, %v349
    %v362 = vshrl.u32 920167782, %v350
    %v363 = vor.u32 %v361, %v362
    %v364 = vshll.u32 920167782, %v349
    %v365 = vshrl.u32 1326507024, %v350
    %v366 = vor.u32 %v364, %v365
    %vm367 = vcmp.lt.s32.totalorder %v348, 1
    %vm368 = vcmp.lt.s32.totalorder %v348, 2
    %vm369 = vcmp.lt.s32.totalorder %v348, 3
    %vm370 = vcmp.lt.s32.totalorder %v348, 4
    %v371 = vsel %vm367, %v351, %v354
    %v372 = vsel %vm370, %v360, 2102212464
    %v373 = vsel %vm369, %v357, %v372
    %v374 = vsel %vm368, %v371, %v373
    %v375 = vsel %vm367, %v354, %v357
    %v376 = vsel %vm370, %v363, 920167782
    %v377 = vsel %vm369, %v360, %v376
    %v378 = vsel %vm368, %v375, %v377
    %v379 = vsel %vm367, %v357, %v360
    %v380 = vsel %vm370, %v366, 1326507024
    %v381 = vsel %vm369, %v363, %v380
    %v382 = vsel %vm368, %v379, %v381
    %v383 = vshll.u32 %v343, 8
    %v384 = vmul.u32.u64.compose %v383, %v382
    %v385 = vextract.low.u32 %v384
    %v386 = vextract.high.u32 %v384
    %v387 = vmul.u32.u64.compose %v383, %v378
    %v388 = vextract.low.u32 %v387
    %v389 = vextract.high.u32 %v387
    %v390 = vmul.u32 %v383, %v374
    %v391 = vadd.s32 %v386, %v388
    %vm392 = vc.u32 %v386, %v388
    %v393 = vadd.s32 %v389, 1
    %v394 = vsel %vm392, %v393, %v389
    %v395 = vadd.s32 %v390, %v394
    %v396 = vadd.s32 %v395, 536870912
    %v397 = vshrl.u32 %v396, 30
    %v398 = vshll.u32 %v397, 30
    %v399 = vsub.s32 %v395, %v398
    %vm400 = vcmp.lt.s32.totalorder %v399, 0
    %v401 = vsub.s32 0, %v399
    %v402 = vsel %vm400, %v401, %v399
    %v403 = vclz %v402
    %v404 = vsub.s32 %v403, 2
    %vm405 = vcmp.gt.s32.totalorder 0, %v404
    %v406 = vsel %vm405, 0, %v404
    %v407 = vsub.s32 32, %v406
    %v408 = vshll.u32 %v399, %v406
    %v409 = vshrl.u32 %v391, %v407
    %v410 = vor.u32 %v408, %v409
    %v411 = vsub.s32 4294967266, %v406
    %v412 = vadd.s32 %v411, 127
    %v413 = vshll.u32 %v412, 23
    %v414 = vor.u32 4788187, %v413
    %v415 = vand.u32 2147483647, %v414
    %v417 = vcvt.s32.f32 %v410
    %v418 = vmul.f32 %v417, %v415
    %v419 = vxor.u32 %v418, 2147483648
    %v420 = vsel %vm337, %v419, %v418
    %v421 = vsub.s32 4, %v397
    %v422 = vsel %vm337, %v421, %v397
    %v423 = vsel %vm336, %v121, %v420
    %v424 = vsel %vm336, 0, %v422
    %v425 = vcosq.f32.pop %v423
    %v426 = vsinq.f32.pop %v423
    %vm427 = vweird.f32 %v121
    %v428 = vadd.s32 %v424, 3
    %v429 = vand.u32 %v428, 3
    %vm430 = vcmp.lt.s32.totalorder %v429, 2
    %vm431 = vcmp.eq.s32.totalorder %v429, 0
    %v432 = vxor.u32 %v426, 2147483648
    %v433 = vsel %vm431, %v425, %v432
    %vm434 = vcmp.eq.s32.totalorder %v429, 2
    %v435 = vxor.u32 %v425, 2147483648
    %v436 = vsel %vm434, %v435, %v426
    %v437 = vsel %vm430, %v433, %v436
    %v438 = vsel %vm427, nan, %v437
    %v439 = vand.u32 2147483647, %v122
    %vm440 = vcmp.le.f32.partialorder %v439, 0.7853982
    %vm441 = vcmp.lt.s32.totalorder %v122, 0
    %v442 = vand.u32 %v122, 2139095040
    %v443 = vshrl.u32 %v442, 23
    %v444 = vsub.s32 %v443, 127
    %v445 = vand.u32 2147483647, %v122
    %v446 = vand.u32 %v445, 8388607
    %v447 = vor.u32 %v446, 8388608
    %v448 = vsub.s32 0, %v447
    %v449 = vadd.s32 %v444, 1
    %vm450 = vcmp.gt.s32.totalorder %v449, 0
    %v451 = vsel %vm450, %v449, 0
    %v452 = vshrl.u32 %v451, 5
    %v453 = vand.u32 %v451, 31
    %v454 = vsub.s32 32, %v453
    %v455 = vshrl.u32 683565275, %v454
    %v456 = vshll.u32 683565275, %v453
    %v457 = vshrl.u32 2475754826, %v454
    %v458 = vor.u32 %v456, %v457
    %v459 = vshll.u32 2475754826, %v453
    %v460 = vshrl.u32 2131351028, %v454
    %v461 = vor.u32 %v459, %v460
    %v462 = vshll.u32 2131351028, %v453
    %v463 = vshrl.u32 2102212464, %v454
    %v464 = vor.u32 %v462, %v463
    %v465 = vshll.u32 2102212464, %v453
    %v466 = vshrl.u32 920167782, %v454
    %v467 = vor.u32 %v465, %v466
    %v468 = vshll.u32 920167782, %v453
    %v469 = vshrl.u32 1326507024, %v454
    %v470 = vor.u32 %v468, %v469
    %vm471 = vcmp.lt.s32.totalorder %v452, 1
    %vm472 = vcmp.lt.s32.totalorder %v452, 2
    %vm473 = vcmp.lt.s32.totalorder %v452, 3
    %vm474 = vcmp.lt.s32.totalorder %v452, 4
    %v475 = vsel %vm471, %v455, %v458
    %v476 = vsel %vm474, %v464, 2102212464
    %v477 = vsel %vm473, %v461, %v476
    %v478 = vsel %vm472, %v475, %v477
    %v479 = vsel %vm471, %v458, %v461
    %v480 = vsel %vm474, %v467, 920167782
    %v481 = vsel %vm473, %v464, %v480
    %v482 = vsel %vm472, %v479, %v481
    %v483 = vsel %vm471, %v461, %v464
    %v484 = vsel %vm474, %v470, 1326507024
    %v485 = vsel %vm473, %v467, %v484
    %v486 = vsel %vm472, %v483, %v485
    %v487 = vshll.u32 %v447, 8
    %v488 = vmul.u32.u64.compose %v487, %v486
    %v489 = vextract.low.u32 %v488
    %v490 = vextract.high.u32 %v488
    %v491 = vmul.u32.u64.compose %v487, %v482
    %v492 = vextract.low.u32 %v491
    %v493 = vextract.high.u32 %v491
    %v494 = vmul.u32 %v487, %v478
    %v495 = vadd.s32 %v490, %v492
    %vm496 = vc.u32 %v490, %v492
    %v497 = vadd.s32 %v493, 1
    %v498 = vsel %vm496, %v497, %v493
    %v499 = vadd.s32 %v494, %v498
    %v500 = vadd.s32 %v499, 536870912
    %v501 = vshrl.u32 %v500, 30
    %v502 = vshll.u32 %v501, 30
    %v503 = vsub.s32 %v499, %v502
    %vm504 = vcmp.lt.s32.totalorder %v503, 0
    %v505 = vsub.s32 0, %v503
    %v506 = vsel %vm504, %v505, %v503
    %v507 = vclz %v506
    %v508 = vsub.s32 %v507, 2
    %vm509 = vcmp.gt.s32.totalorder 0, %v508
    %v510 = vsel %vm509, 0, %v508
    %v511 = vsub.s32 32, %v510
    %v512 = vshll.u32 %v503, %v510
    %v513 = vshrl.u32 %v495, %v511
    %v514 = vor.u32 %v512, %v513
    %v515 = vsub.s32 4294967266, %v510
    %v516 = vadd.s32 %v515, 127
    %v517 = vshll.u32 %v516, 23
    %v518 = vor.u32 4788187, %v517
    %v519 = vand.u32 2147483647, %v518
    %v521 = vcvt.s32.f32 %v514
    %v522 = vmul.f32 %v521, %v519
    %v523 = vxor.u32 %v522, 2147483648
    %v524 = vsel %vm441, %v523, %v522
    %v525 = vsub.s32 4, %v501
    %v526 = vsel %vm441, %v525, %v501
    %v527 = vsel %vm440, %v122, %v524
    %v528 = vsel %vm440, 0, %v526
    %v529 = vcosq.f32.pop %v527
    %v530 = vsinq.f32.pop %v527
    %vm531 = vweird.f32 %v122
    %v532 = vadd.s32 %v528, 3
    %v533 = vand.u32 %v532, 3
    %vm534 = vcmp.lt.s32.totalorder %v533, 2
    %vm535 = vcmp.eq.s32.totalorder %v533, 0
    %v536 = vxor.u32 %v530, 2147483648
    %v537 = vsel %vm535, %v529, %v536
    %vm538 = vcmp.eq.s32.totalorder %v533, 2
    %v539 = vxor.u32 %v529, 2147483648
    %v540 = vsel %vm538, %v539, %v530
    %v541 = vsel %vm534, %v537, %v540
    %v542 = vsel %vm531, nan, %v541
    %v543 = vand.u32 2147483647, %v123
    %vm544 = vcmp.le.f32.partialorder %v543, 0.7853982
    %vm545 = vcmp.lt.s32.totalorder %v123, 0
    %v546 = vand.u32 %v123, 2139095040
    %v547 = vshrl.u32 %v546, 23
    %v548 = vsub.s32 %v547, 127
    %v549 = vand.u32 2147483647, %v123
    %v550 = vand.u32 %v549, 8388607
    %v551 = vor.u32 %v550, 8388608
    %v552 = vsub.s32 0, %v551
    %v553 = vadd.s32 %v548, 1
    %vm554 = vcmp.gt.s32.totalorder %v553, 0
    %v555 = vsel %vm554, %v553, 0
    %v556 = vshrl.u32 %v555, 5
    %v557 = vand.u32 %v555, 31
    %v558 = vsub.s32 32, %v557
    %v559 = vshrl.u32 683565275, %v558
    %v560 = vshll.u32 683565275, %v557
    %v561 = vshrl.u32 2475754826, %v558
    %v562 = vor.u32 %v560, %v561
    %v563 = vshll.u32 2475754826, %v557
    %v564 = vshrl.u32 2131351028, %v558
    %v565 = vor.u32 %v563, %v564
    %v566 = vshll.u32 2131351028, %v557
    %v567 = vshrl.u32 2102212464, %v558
    %v568 = vor.u32 %v566, %v567
    %v569 = vshll.u32 2102212464, %v557
    %v570 = vshrl.u32 920167782, %v558
    %v571 = vor.u32 %v569, %v570
    %v572 = vshll.u32 920167782, %v557
    %v573 = vshrl.u32 1326507024, %v558
    %v574 = vor.u32 %v572, %v573
    %vm575 = vcmp.lt.s32.totalorder %v556, 1
    %vm576 = vcmp.lt.s32.totalorder %v556, 2
    %vm577 = vcmp.lt.s32.totalorder %v556, 3
    %vm578 = vcmp.lt.s32.totalorder %v556, 4
    %v579 = vsel %vm575, %v559, %v562
    %v580 = vsel %vm578, %v568, 2102212464
    %v581 = vsel %vm577, %v565, %v580
    %v582 = vsel %vm576, %v579, %v581
    %v583 = vsel %vm575, %v562, %v565
    %v584 = vsel %vm578, %v571, 920167782
    %v585 = vsel %vm577, %v568, %v584
    %v586 = vsel %vm576, %v583, %v585
    %v587 = vsel %vm575, %v565, %v568
    %v588 = vsel %vm578, %v574, 1326507024
    %v589 = vsel %vm577, %v571, %v588
    %v590 = vsel %vm576, %v587, %v589
    %v591 = vshll.u32 %v551, 8
    %v592 = vmul.u32.u64.compose %v591, %v590
    %v593 = vextract.low.u32 %v592
    %v594 = vextract.high.u32 %v592
    %v595 = vmul.u32.u64.compose %v591, %v586
    %v596 = vextract.low.u32 %v595
    %v597 = vextract.high.u32 %v595
    %v598 = vmul.u32 %v591, %v582
    %v599 = vadd.s32 %v594, %v596
    %vm600 = vc.u32 %v594, %v596
    %v601 = vadd.s32 %v597, 1
    %v602 = vsel %vm600, %v601, %v597
    %v603 = vadd.s32 %v598, %v602
    %v604 = vadd.s32 %v603, 536870912
    %v605 = vshrl.u32 %v604, 30
    %v606 = vshll.u32 %v605, 30
    %v607 = vsub.s32 %v603, %v606
    %vm608 = vcmp.lt.s32.totalorder %v607, 0
    %v609 = vsub.s32 0, %v607
    %v610 = vsel %vm608, %v609, %v607
    %v611 = vclz %v610
    %v612 = vsub.s32 %v611, 2
    %vm613 = vcmp.gt.s32.totalorder 0, %v612
    %v614 = vsel %vm613, 0, %v612
    %v615 = vsub.s32 32, %v614
    %v616 = vshll.u32 %v607, %v614
    %v617 = vshrl.u32 %v599, %v615
    %v618 = vor.u32 %v616, %v617
    %v619 = vsub.s32 4294967266, %v614
    %v620 = vadd.s32 %v619, 127
    %v621 = vshll.u32 %v620, 23
    %v622 = vor.u32 4788187, %v621
    %v623 = vand.u32 2147483647, %v622
    %v625 = vcvt.s32.f32 %v618
    %v626 = vmul.f32 %v625, %v623
    %v627 = vxor.u32 %v626, 2147483648
    %v628 = vsel %vm545, %v627, %v626
    %v629 = vsub.s32 4, %v605
    %v630 = vsel %vm545, %v629, %v605
    %v631 = vsel %vm544, %v123, %v628
    %v632 = vsel %vm544, 0, %v630
    %v633 = vcosq.f32.pop %v631
    %v634 = vsinq.f32.pop %v631
    %vm635 = vweird.f32 %v123
    %v636 = vadd.s32 %v632, 3
    %v637 = vand.u32 %v636, 3
    %vm638 = vcmp.lt.s32.totalorder %v637, 2
    %vm639 = vcmp.eq.s32.totalorder %v637, 0
    %v640 = vxor.u32 %v634, 2147483648
    %v641 = vsel %vm639, %v633, %v640
    %vm642 = vcmp.eq.s32.totalorder %v637, 2
    %v643 = vxor.u32 %v633, 2147483648
    %v644 = vsel %vm642, %v643, %v634
    %v645 = vsel %vm638, %v641, %v644
    %v646 = vsel %vm635, nan, %v645
    %v647 = vand.u32 2147483647, %v124
    %vm648 = vcmp.le.f32.partialorder %v647, 0.7853982
    %vm649 = vcmp.lt.s32.totalorder %v124, 0
    %v650 = vand.u32 %v124, 2139095040
    %v651 = vshrl.u32 %v650, 23
    %v652 = vsub.s32 %v651, 127
    %v653 = vand.u32 2147483647, %v124
    %v654 = vand.u32 %v653, 8388607
    %v655 = vor.u32 %v654, 8388608
    %v656 = vsub.s32 0, %v655
    %v657 = vadd.s32 %v652, 1
    %vm658 = vcmp.gt.s32.totalorder %v657, 0
    %v659 = vsel %vm658, %v657, 0
    %v660 = vshrl.u32 %v659, 5
    %v661 = vand.u32 %v659, 31
    %v662 = vsub.s32 32, %v661
    %v663 = vshrl.u32 683565275, %v662
    %v664 = vshll.u32 683565275, %v661
    %v665 = vshrl.u32 2475754826, %v662
    %v666 = vor.u32 %v664, %v665
    %v667 = vshll.u32 2475754826, %v661
    %v668 = vshrl.u32 2131351028, %v662
    %v669 = vor.u32 %v667, %v668
    %v670 = vshll.u32 2131351028, %v661
    %v671 = vshrl.u32 2102212464, %v662
    %v672 = vor.u32 %v670, %v671
    %v673 = vshll.u32 2102212464, %v661
    %v674 = vshrl.u32 920167782, %v662
    %v675 = vor.u32 %v673, %v674
    %v676 = vshll.u32 920167782, %v661
    %v677 = vshrl.u32 1326507024, %v662
    %v678 = vor.u32 %v676, %v677
    %vm679 = vcmp.lt.s32.totalorder %v660, 1
    %vm680 = vcmp.lt.s32.totalorder %v660, 2
    %vm681 = vcmp.lt.s32.totalorder %v660, 3
    %vm682 = vcmp.lt.s32.totalorder %v660, 4
    %v683 = vsel %vm679, %v663, %v666
    %v684 = vsel %vm682, %v672, 2102212464
    %v685 = vsel %vm681, %v669, %v684
    %v686 = vsel %vm680, %v683, %v685
    %v687 = vsel %vm679, %v666, %v669
    %v688 = vsel %vm682, %v675, 920167782
    %v689 = vsel %vm681, %v672, %v688
    %v690 = vsel %vm680, %v687, %v689
    %v691 = vsel %vm679, %v669, %v672
    %v692 = vsel %vm682, %v678, 1326507024
    %v693 = vsel %vm681, %v675, %v692
    %v694 = vsel %vm680, %v691, %v693
    %v695 = vshll.u32 %v655, 8
    %v696 = vmul.u32.u64.compose %v695, %v694
    %v697 = vextract.low.u32 %v696
    %v698 = vextract.high.u32 %v696
    %v699 = vmul.u32.u64.compose %v695, %v690
    %v700 = vextract.low.u32 %v699
    %v701 = vextract.high.u32 %v699
    %v702 = vmul.u32 %v695, %v686
    %v703 = vadd.s32 %v698, %v700
    %vm704 = vc.u32 %v698, %v700
    %v705 = vadd.s32 %v701, 1
    %v706 = vsel %vm704, %v705, %v701
    %v707 = vadd.s32 %v702, %v706
    %v708 = vadd.s32 %v707, 536870912
    %v709 = vshrl.u32 %v708, 30
    %v710 = vshll.u32 %v709, 30
    %v711 = vsub.s32 %v707, %v710
    %vm712 = vcmp.lt.s32.totalorder %v711, 0
    %v713 = vsub.s32 0, %v711
    %v714 = vsel %vm712, %v713, %v711
    %v715 = vclz %v714
    %v716 = vsub.s32 %v715, 2
    %vm717 = vcmp.gt.s32.totalorder 0, %v716
    %v718 = vsel %vm717, 0, %v716
    %v719 = vsub.s32 32, %v718
    %v720 = vshll.u32 %v711, %v718
    %v721 = vshrl.u32 %v703, %v719
    %v722 = vor.u32 %v720, %v721
    %v723 = vsub.s32 4294967266, %v718
    %v724 = vadd.s32 %v723, 127
    %v725 = vshll.u32 %v724, 23
    %v726 = vor.u32 4788187, %v725
    %v727 = vand.u32 2147483647, %v726
    %v729 = vcvt.s32.f32 %v722
    %v730 = vmul.f32 %v729, %v727
    %v731 = vxor.u32 %v730, 2147483648
    %v732 = vsel %vm649, %v731, %v730
    %v733 = vsub.s32 4, %v709
    %v734 = vsel %vm649, %v733, %v709
    %v735 = vsel %vm648, %v124, %v732
    %v736 = vsel %vm648, 0, %v734
    %v737 = vcosq.f32.pop %v735
    %v738 = vsinq.f32.pop %v735
    %vm739 = vweird.f32 %v124
    %v740 = vadd.s32 %v736, 3
    %v741 = vand.u32 %v740, 3
    %vm742 = vcmp.lt.s32.totalorder %v741, 2
    %vm743 = vcmp.eq.s32.totalorder %v741, 0
    %v744 = vxor.u32 %v738, 2147483648
    %v745 = vsel %vm743, %v737, %v744
    %vm746 = vcmp.eq.s32.totalorder %v741, 2
    %v747 = vxor.u32 %v737, 2147483648
    %v748 = vsel %vm746, %v747, %v738
    %v749 = vsel %vm742, %v745, %v748
    %v750 = vsel %vm739, nan, %v749
    %v751 = vand.u32 2147483647, %v125
    %vm752 = vcmp.le.f32.partialorder %v751, 0.7853982
    %vm753 = vcmp.lt.s32.totalorder %v125, 0
    %v754 = vand.u32 %v125, 2139095040
    %v755 = vshrl.u32 %v754, 23
    %v756 = vsub.s32 %v755, 127
    %v757 = vand.u32 2147483647, %v125
    %v758 = vand.u32 %v757, 8388607
    %v759 = vor.u32 %v758, 8388608
    %v760 = vsub.s32 0, %v759
    %v761 = vadd.s32 %v756, 1
    %vm762 = vcmp.gt.s32.totalorder %v761, 0
    %v763 = vsel %vm762, %v761, 0
    %v764 = vshrl.u32 %v763, 5
    %v765 = vand.u32 %v763, 31
    %v766 = vsub.s32 32, %v765
    %v767 = vshrl.u32 683565275, %v766
    %v768 = vshll.u32 683565275, %v765
    %v769 = vshrl.u32 2475754826, %v766
    %v770 = vor.u32 %v768, %v769
    %v771 = vshll.u32 2475754826, %v765
    %v772 = vshrl.u32 2131351028, %v766
    %v773 = vor.u32 %v771, %v772
    %v774 = vshll.u32 2131351028, %v765
    %v775 = vshrl.u32 2102212464, %v766
    %v776 = vor.u32 %v774, %v775
    %v777 = vshll.u32 2102212464, %v765
    %v778 = vshrl.u32 920167782, %v766
    %v779 = vor.u32 %v777, %v778
    %v780 = vshll.u32 920167782, %v765
    %v781 = vshrl.u32 1326507024, %v766
    %v782 = vor.u32 %v780, %v781
    %vm783 = vcmp.lt.s32.totalorder %v764, 1
    %vm784 = vcmp.lt.s32.totalorder %v764, 2
    %vm785 = vcmp.lt.s32.totalorder %v764, 3
    %vm786 = vcmp.lt.s32.totalorder %v764, 4
    %v787 = vsel %vm783, %v767, %v770
    %v788 = vsel %vm786, %v776, 2102212464
    %v789 = vsel %vm785, %v773, %v788
    %v790 = vsel %vm784, %v787, %v789
    %v791 = vsel %vm783, %v770, %v773
    %v792 = vsel %vm786, %v779, 920167782
    %v793 = vsel %vm785, %v776, %v792
    %v794 = vsel %vm784, %v791, %v793
    %v795 = vsel %vm783, %v773, %v776
    %v796 = vsel %vm786, %v782, 1326507024
    %v797 = vsel %vm785, %v779, %v796
    %v798 = vsel %vm784, %v795, %v797
    %v799 = vshll.u32 %v759, 8
    %v800 = vmul.u32.u64.compose %v799, %v798
    %v801 = vextract.low.u32 %v800
    %v802 = vextract.high.u32 %v800
    %v803 = vmul.u32.u64.compose %v799, %v794
    %v804 = vextract.low.u32 %v803
    %v805 = vextract.high.u32 %v803
    %v806 = vmul.u32 %v799, %v790
    %v807 = vadd.s32 %v802, %v804
    %vm808 = vc.u32 %v802, %v804
    %v809 = vadd.s32 %v805, 1
    %v810 = vsel %vm808, %v809, %v805
    %v811 = vadd.s32 %v806, %v810
    %v812 = vadd.s32 %v811, 536870912
    %v813 = vshrl.u32 %v812, 30
    %v814 = vshll.u32 %v813, 30
    %v815 = vsub.s32 %v811, %v814
    %vm816 = vcmp.lt.s32.totalorder %v815, 0
    %v817 = vsub.s32 0, %v815
    %v818 = vsel %vm816, %v817, %v815
    %v819 = vclz %v818
    %v820 = vsub.s32 %v819, 2
    %vm821 = vcmp.gt.s32.totalorder 0, %v820
    %v822 = vsel %vm821, 0, %v820
    %v823 = vsub.s32 32, %v822
    %v824 = vshll.u32 %v815, %v822
    %v825 = vshrl.u32 %v807, %v823
    %v826 = vor.u32 %v824, %v825
    %v827 = vsub.s32 4294967266, %v822
    %v828 = vadd.s32 %v827, 127
    %v829 = vshll.u32 %v828, 23
    %v830 = vor.u32 4788187, %v829
    %v831 = vand.u32 2147483647, %v830
    %v833 = vcvt.s32.f32 %v826
    %v834 = vmul.f32 %v833, %v831
    %v835 = vxor.u32 %v834, 2147483648
    %v836 = vsel %vm753, %v835, %v834
    %v837 = vsub.s32 4, %v813
    %v838 = vsel %vm753, %v837, %v813
    %v839 = vsel %vm752, %v125, %v836
    %v840 = vsel %vm752, 0, %v838
    %v841 = vcosq.f32.pop %v839
    %v842 = vsinq.f32.pop %v839
    %vm843 = vweird.f32 %v125
    %v844 = vadd.s32 %v840, 3
    %v845 = vand.u32 %v844, 3
    %vm846 = vcmp.lt.s32.totalorder %v845, 2
    %vm847 = vcmp.eq.s32.totalorder %v845, 0
    %v848 = vxor.u32 %v842, 2147483648
    %v849 = vsel %vm847, %v841, %v848
    %vm850 = vcmp.eq.s32.totalorder %v845, 2
    %v851 = vxor.u32 %v841, 2147483648
    %v852 = vsel %vm850, %v851, %v842
    %v853 = vsel %vm846, %v849, %v852
    %v854 = vsel %vm843, nan, %v853
    %v855 = vand.u32 2147483647, %v126
    %vm856 = vcmp.le.f32.partialorder %v855, 0.7853982
    %vm857 = vcmp.lt.s32.totalorder %v126, 0
    %v858 = vand.u32 %v126, 2139095040
    %v859 = vshrl.u32 %v858, 23
    %v860 = vsub.s32 %v859, 127
    %v861 = vand.u32 2147483647, %v126
    %v862 = vand.u32 %v861, 8388607
    %v863 = vor.u32 %v862, 8388608
    %v864 = vsub.s32 0, %v863
    %v865 = vadd.s32 %v860, 1
    %vm866 = vcmp.gt.s32.totalorder %v865, 0
    %v867 = vsel %vm866, %v865, 0
    %v868 = vshrl.u32 %v867, 5
    %v869 = vand.u32 %v867, 31
    %v870 = vsub.s32 32, %v869
    %v871 = vshrl.u32 683565275, %v870
    %v872 = vshll.u32 683565275, %v869
    %v873 = vshrl.u32 2475754826, %v870
    %v874 = vor.u32 %v872, %v873
    %v875 = vshll.u32 2475754826, %v869
    %v876 = vshrl.u32 2131351028, %v870
    %v877 = vor.u32 %v875, %v876
    %v878 = vshll.u32 2131351028, %v869
    %v879 = vshrl.u32 2102212464, %v870
    %v880 = vor.u32 %v878, %v879
    %v881 = vshll.u32 2102212464, %v869
    %v882 = vshrl.u32 920167782, %v870
    %v883 = vor.u32 %v881, %v882
    %v884 = vshll.u32 920167782, %v869
    %v885 = vshrl.u32 1326507024, %v870
    %v886 = vor.u32 %v884, %v885
    %vm887 = vcmp.lt.s32.totalorder %v868, 1
    %vm888 = vcmp.lt.s32.totalorder %v868, 2
    %vm889 = vcmp.lt.s32.totalorder %v868, 3
    %vm890 = vcmp.lt.s32.totalorder %v868, 4
    %v891 = vsel %vm887, %v871, %v874
    %v892 = vsel %vm890, %v880, 2102212464
    %v893 = vsel %vm889, %v877, %v892
    %v894 = vsel %vm888, %v891, %v893
    %v895 = vsel %vm887, %v874, %v877
    %v896 = vsel %vm890, %v883, 920167782
    %v897 = vsel %vm889, %v880, %v896
    %v898 = vsel %vm888, %v895, %v897
    %v899 = vsel %vm887, %v877, %v880
    %v900 = vsel %vm890, %v886, 1326507024
    %v901 = vsel %vm889, %v883, %v900
    %v902 = vsel %vm888, %v899, %v901
    %v903 = vshll.u32 %v863, 8
    %v904 = vmul.u32.u64.compose %v903, %v902
    %v905 = vextract.low.u32 %v904
    %v906 = vextract.high.u32 %v904
    %v907 = vmul.u32.u64.compose %v903, %v898
    %v908 = vextract.low.u32 %v907
    %v909 = vextract.high.u32 %v907
    %v910 = vmul.u32 %v903, %v894
    %v911 = vadd.s32 %v906, %v908
    %vm912 = vc.u32 %v906, %v908
    %v913 = vadd.s32 %v909, 1
    %v914 = vsel %vm912, %v913, %v909
    %v915 = vadd.s32 %v910, %v914
    %v916 = vadd.s32 %v915, 536870912
    %v917 = vshrl.u32 %v916, 30
    %v918 = vshll.u32 %v917, 30
    %v919 = vsub.s32 %v915, %v918
    %vm920 = vcmp.lt.s32.totalorder %v919, 0
    %v921 = vsub.s32 0, %v919
    %v922 = vsel %vm920, %v921, %v919
    %v923 = vclz %v922
    %v924 = vsub.s32 %v923, 2
    %vm925 = vcmp.gt.s32.totalorder 0, %v924
    %v926 = vsel %vm925, 0, %v924
    %v927 = vsub.s32 32, %v926
    %v928 = vshll.u32 %v919, %v926
    %v929 = vshrl.u32 %v911, %v927
    %v930 = vor.u32 %v928, %v929
    %v931 = vsub.s32 4294967266, %v926
    %v932 = vadd.s32 %v931, 127
    %v933 = vshll.u32 %v932, 23
    %v934 = vor.u32 4788187, %v933
    %v935 = vand.u32 2147483647, %v934
    %v937 = vcvt.s32.f32 %v930
    %v938 = vmul.f32 %v937, %v935
    %v939 = vxor.u32 %v938, 2147483648
    %v940 = vsel %vm857, %v939, %v938
    %v941 = vsub.s32 4, %v917
    %v942 = vsel %vm857, %v941, %v917
    %v943 = vsel %vm856, %v126, %v940
    %v944 = vsel %vm856, 0, %v942
    %v945 = vcosq.f32.pop %v943
    %v946 = vsinq.f32.pop %v943
    %vm947 = vweird.f32 %v126
    %v948 = vadd.s32 %v944, 3
    %v949 = vand.u32 %v948, 3
    %vm950 = vcmp.lt.s32.totalorder %v949, 2
    %vm951 = vcmp.eq.s32.totalorder %v949, 0
    %v952 = vxor.u32 %v946, 2147483648
    %v953 = vsel %vm951, %v945, %v952
    %vm954 = vcmp.eq.s32.totalorder %v949, 2
    %v955 = vxor.u32 %v945, 2147483648
    %v956 = vsel %vm954, %v955, %v946
    %v957 = vsel %vm950, %v953, %v956
    %v958 = vsel %vm947, nan, %v957
    %v959 = vld [vmem:[#allocation2 + $0x40] sm:$0xff]
    %v960 = vld [vmem:[#allocation2 + $0x48] sm:$0xff]
    %v961 = vld [vmem:[#allocation2 + $0x50] sm:$0xff]
    %v962 = vld [vmem:[#allocation2 + $0x58] sm:$0xff]
    %v963 = vld [vmem:[#allocation2 + $0x60] sm:$0xff]
    %v964 = vld [vmem:[#allocation2 + $0x68] sm:$0xff]
    %v965 = vld [vmem:[#allocation2 + $0x70] sm:$0xff]
    %v966 = vld [vmem:[#allocation2 + $0x78] sm:$0xff]
    %v967 = vld [vmem:[#allocation2 + $0x80] sm:$0xff]
    %v968 = vld [vmem:[#allocation2 + $0x88] sm:$0xff]
    %v969 = vld [vmem:[#allocation2 + $0x90] sm:$0xff]
    %v970 = vld [vmem:[#allocation2 + $0x98] sm:$0xff]
    %v971 = vld [vmem:[#allocation2 + $0xa0] sm:$0xff]
    %v972 = vld [vmem:[#allocation2 + $0xa8] sm:$0xff]
    %v973 = vld [vmem:[#allocation2 + $0xb0] sm:$0xff]
    %v974 = vld [vmem:[#allocation2 + $0xb8] sm:$0xff]
    %v975 = vpack.c.bf16 %v960, %v959
    %v976 = vpack.c.bf16 %v962, %v961
    %v977 = vpack.c.bf16 %v964, %v963
    %v978 = vpack.c.bf16 %v966, %v965
    %v979 = vpack.c.bf16 %v968, %v967
    %v980 = vpack.c.bf16 %v970, %v969
    %v981 = vpack.c.bf16 %v972, %v971
    %v982 = vpack.c.bf16 %v974, %v973
    %v983 = vpack.c.bf16 %v334, %v230
    %v984 = vpack.c.bf16 %v542, %v438
    %v985 = vpack.c.bf16 %v750, %v646
    %v986 = vpack.c.bf16 %v958, %v854
    %988 = vset.pattern.permute.xlu0 64
    %989 = vperm.xlu0 %988, %v959
    %v990 = vpop.permute.xlu0 %989
    %993 = vset.pattern.permute.xlu0 64
    %994 = vperm.xlu0 %993, %v960
    %v995 = vpop.permute.xlu0 %994
    %998 = vset.pattern.permute.xlu0 64
    %999 = vperm.xlu0 %998, %v961
    %v1000 = vpop.permute.xlu0 %999
    %1003 = vset.pattern.permute.xlu0 64
    %1004 = vperm.xlu0 %1003, %v962
    %v1005 = vpop.permute.xlu0 %1004
    %1008 = vset.pattern.permute.xlu0 64
    %1009 = vperm.xlu0 %1008, %v963
    %v1010 = vpop.permute.xlu0 %1009
    %1013 = vset.pattern.permute.xlu0 64
    %1014 = vperm.xlu0 %1013, %v964
    %v1015 = vpop.permute.xlu0 %1014
    %1018 = vset.pattern.permute.xlu0 64
    %1019 = vperm.xlu0 %1018, %v965
    %v1020 = vpop.permute.xlu0 %1019
    %1023 = vset.pattern.permute.xlu0 64
    %1024 = vperm.xlu0 %1023, %v966
    %v1025 = vpop.permute.xlu0 %1024
    %1028 = vset.pattern.permute.xlu0 64
    %1029 = vperm.xlu0 %1028, %v967
    %v1030 = vpop.permute.xlu0 %1029
    %1033 = vset.pattern.permute.xlu0 64
    %1034 = vperm.xlu0 %1033, %v968
    %v1035 = vpop.permute.xlu0 %1034
    %1038 = vset.pattern.permute.xlu0 64
    %1039 = vperm.xlu0 %1038, %v969
    %v1040 = vpop.permute.xlu0 %1039
    %1043 = vset.pattern.permute.xlu0 64
    %1044 = vperm.xlu0 %1043, %v970
    %v1045 = vpop.permute.xlu0 %1044
    %1048 = vset.pattern.permute.xlu0 64
    %1049 = vperm.xlu0 %1048, %v971
    %v1050 = vpop.permute.xlu0 %1049
    %1053 = vset.pattern.permute.xlu0 64
    %1054 = vperm.xlu0 %1053, %v972
    %v1055 = vpop.permute.xlu0 %1054
    %1058 = vset.pattern.permute.xlu0 64
    %1059 = vperm.xlu0 %1058, %v973
    %v1060 = vpop.permute.xlu0 %1059
    %1063 = vset.pattern.permute.xlu0 64
    %1064 = vperm.xlu0 %1063, %v974
    %v1065 = vpop.permute.xlu0 %1064
    %vm1067 = vcmask 523264
    %v1069 = vsel %vm1067, %v975, 0
    %v1072 = vsel %vm1067, %v976, 0
    %v1075 = vsel %vm1067, %v977, 0
    %v1078 = vsel %vm1067, %v978, 0
    %v1081 = vsel %vm1067, %v979, 0
    %v1084 = vsel %vm1067, %v980, 0
    %v1087 = vsel %vm1067, %v981, 0
    %v1090 = vsel %vm1067, %v982, 0
    %1092 = vmatprep.subr.bf16.mxu0 0
    %1093 = vmatpush1.bf16.msra.mxu0 %v983
    %1094 = vmatprep.subr.bf16.mxu0 0
    %1095 = vmatpush1.bf16.msra.mxu0 %v984
    %1096 = vmatprep.subr.bf16.mxu0 0
    %1097 = vmatpush1.bf16.msra.mxu0 %v985
    %1098 = vmatprep.subr.bf16.mxu0 0
    %1099 = vmatpush1.bf16.msra.mxu0 %v986
    %1100 = vmatprep.subr.bf16.mxu0 0
    %1101 = vmatpush1.bf16.msra.mxu0 0
    %1102 = vmatprep.subr.bf16.mxu0 0
    %1103 = vmatpush1.bf16.msra.mxu0 0
    %1104 = vmatprep.subr.bf16.mxu0 0
    %1105 = vmatpush1.bf16.msra.mxu0 0
    %1106 = vmatprep.subr.bf16.mxu0 0
    %1107 = vmatpush1.bf16.msra.mxu0 0
    %1108 = vmatprep.subr.bf16.mxu0 0
    %1109 = vmatpush1.bf16.msra.mxu0 0
    %1110 = vmatprep.subr.bf16.mxu0 0
    %1111 = vmatpush1.bf16.msra.mxu0 0
    %1112 = vmatprep.subr.bf16.mxu0 0
    %1113 = vmatpush1.bf16.msra.mxu0 0
    %1114 = vmatprep.subr.bf16.mxu0 0
    %1115 = vmatpush1.bf16.msra.mxu0 0
    %1116 = vmatprep.subr.bf16.mxu0 0
    %1117 = vmatpush1.bf16.msra.mxu0 0
    %1118 = vmatprep.subr.bf16.mxu0 0
    %1119 = vmatpush1.bf16.msra.mxu0 0
    %1120 = vmatprep.subr.bf16.mxu0 0
    %1121 = vmatpush1.bf16.msra.mxu0 0
    %1122 = vmatprep.subr.bf16.mxu0 0
    %1123 = vmatpush1.bf16.msra.mxu0 0
    %1124 = vmatprep.mubr.bf16.mxu0 0
    %1125 = vmatmul.mubr.bf16.gmra.mrb[0].mxu0 %v1069
    %v1126 = vpop.f32.mrb[0].mxu0
    %v1127 = vadd.f32 %v990, %v1126
    %v1128 = vpop.f32.mrb[0].mxu0
    %v1129 = vpop.f32.mrb[0].mxu0
    %v1130 = vadd.f32 %v995, %v1129
    %v1131 = vpop.f32.mrb[0].mxu0
    %1132 = vmatprep.mubr.bf16.mxu0 0
    %1133 = vmatmul.mubr.bf16.gmra.mrb[0].mxu0 %v1072
    %v1134 = vpop.f32.mrb[0].mxu0
    %v1135 = vadd.f32 %v1000, %v1134
    %v1136 = vpop.f32.mrb[0].mxu0
    %v1137 = vpop.f32.mrb[0].mxu0
    %v1138 = vadd.f32 %v1005, %v1137
    %v1139 = vpop.f32.mrb[0].mxu0
    %1140 = vmatprep.mubr.bf16.mxu0 0
    %1141 = vmatmul.mubr.bf16.gmra.mrb[0].mxu0 %v1075
    %v1142 = vpop.f32.mrb[0].mxu0
    %v1143 = vadd.f32 %v1010, %v1142
    %v1144 = vpop.f32.mrb[0].mxu0
    %v1145 = vpop.f32.mrb[0].mxu0
    %v1146 = vadd.f32 %v1015, %v1145
    %v1147 = vpop.f32.mrb[0].mxu0
    %1148 = vmatprep.mubr.bf16.mxu0 0
    %1149 = vmatmul.mubr.bf16.gmra.mrb[0].mxu0 %v1078
    %v1150 = vpop.f32.mrb[0].mxu0
    %v1151 = vadd.f32 %v1020, %v1150
    %v1152 = vpop.f32.mrb[0].mxu0
    %v1153 = vpop.f32.mrb[0].mxu0
    %v1154 = vadd.f32 %v1025, %v1153
    %v1155 = vpop.f32.mrb[0].mxu0
    %1156 = vmatprep.mubr.bf16.mxu0 0
    %1157 = vmatmul.mubr.bf16.gmra.mrb[0].mxu0 %v1081
    %v1158 = vpop.f32.mrb[0].mxu0
    %v1159 = vadd.f32 %v1030, %v1158
    %v1160 = vpop.f32.mrb[0].mxu0
    %v1161 = vpop.f32.mrb[0].mxu0
    %v1162 = vadd.f32 %v1035, %v1161
    %v1163 = vpop.f32.mrb[0].mxu0
    %1164 = vmatprep.mubr.bf16.mxu0 0
    %1165 = vmatmul.mubr.bf16.gmra.mrb[0].mxu0 %v1084
    %v1166 = vpop.f32.mrb[0].mxu0
    %v1167 = vadd.f32 %v1040, %v1166
    %v1168 = vpop.f32.mrb[0].mxu0
    %v1169 = vpop.f32.mrb[0].mxu0
    %v1170 = vadd.f32 %v1045, %v1169
    %v1171 = vpop.f32.mrb[0].mxu0
    %1172 = vmatprep.mubr.bf16.mxu0 0
    %1173 = vmatmul.mubr.bf16.gmra.mrb[0].mxu0 %v1087
    %v1174 = vpop.f32.mrb[0].mxu0
    %v1175 = vadd.f32 %v1050, %v1174
    %v1176 = vpop.f32.mrb[0].mxu0
    %v1177 = vpop.f32.mrb[0].mxu0
    %v1178 = vadd.f32 %v1055, %v1177
    %v1179 = vpop.f32.mrb[0].mxu0
    %1180 = vmatprep.mubr.bf16.mxu0 0
    %1181 = vmatmul.mubr.bf16.gmra.mrb[0].mxu0 %v1090
    %v1182 = vpop.f32.mrb[0].mxu0
    %v1183 = vadd.f32 %v1060, %v1182
    %v1184 = vpop.f32.mrb[0].mxu0
    %v1185 = vpop.f32.mrb[0].mxu0
    %v1186 = vadd.f32 %v1065, %v1185
    %v1187 = vpop.f32.mrb[0].mxu0
    %1188 = vdwg.mxu0
    %v1189 = vmax.f32 %v1127, 0.0
    %v1190 = vmax.f32 %v1130, 0.0
    %v1191 = vmax.f32 %v1135, 0.0
    %v1192 = vmax.f32 %v1138, 0.0
    %v1193 = vmax.f32 %v1143, 0.0
    %v1194 = vmax.f32 %v1146, 0.0
    %v1195 = vmax.f32 %v1151, 0.0
    %v1196 = vmax.f32 %v1154, 0.0
    %v1197 = vmax.f32 %v1159, 0.0
    %v1198 = vmax.f32 %v1162, 0.0
    %v1199 = vmax.f32 %v1167, 0.0
    %v1200 = vmax.f32 %v1170, 0.0
    %v1201 = vmax.f32 %v1175, 0.0
    %v1202 = vmax.f32 %v1178, 0.0
    %v1203 = vmax.f32 %v1183, 0.0
    %v1204 = vmax.f32 %v1186, 0.0
    %v1205 = vld [vmem:[#allocation2 + $0xc0] sm:$0xff]
    %v1206 = vld [vmem:[#allocation2 + $0xc8] sm:$0xff]
    %v1207 = vld [vmem:[#allocation2 + $0xd0] sm:$0xff]
    %v1208 = vld [vmem:[#allocation2 + $0xd8] sm:$0xff]
    %v1209 = vld [vmem:[%s0] sm:$0x1]
    %1211 = vset.pattern.permute.xlu0 0
    %1212 = vperm.xlu0 %1211, %v1205
    %v1213 = vpop.permute.xlu0 %1212
    %1216 = vset.pattern.permute.xlu0 0
    %1217 = vperm.xlu0 %1216, %v1206
    %v1218 = vpop.permute.xlu0 %1217
    %1221 = vset.pattern.permute.xlu0 0
    %1222 = vperm.xlu0 %1221, %v1207
    %v1223 = vpop.permute.xlu0 %1222
    %1226 = vset.pattern.permute.xlu0 0
    %1227 = vperm.xlu0 %1226, %v1208
    %v1228 = vpop.permute.xlu0 %1227
    %v1230 = vlaneseq
    %v1231 = vshrl.u32 %v1230, 7
    %v1232 = vsub.s32 0, %v1231
    %v1233 = vrot.slane %v1209, %v1232
    %v1234 = vmul.f32 %v1213, %v1233
    %v1235 = vmul.f32 %v1218, %v1233
    %v1236 = vmul.f32 %v1223, %v1233
    %v1237 = vmul.f32 %v1228, %v1233
    %v1238 = vld [vmem:[%s0 + $0x1] sm:$0x1]
    %1239 = vset.pattern.permute.xlu0 1
    %1240 = vperm.xlu0 %1239, %v1205
    %v1241 = vpop.permute.xlu0 %1240
    %1243 = vset.pattern.permute.xlu0 1
    %1244 = vperm.xlu0 %1243, %v1206
    %v1245 = vpop.permute.xlu0 %1244
    %1247 = vset.pattern.permute.xlu0 1
    %1248 = vperm.xlu0 %1247, %v1207
    %v1249 = vpop.permute.xlu0 %1248
    %1251 = vset.pattern.permute.xlu0 1
    %1252 = vperm.xlu0 %1251, %v1208
    %v1253 = vpop.permute.xlu0 %1252
    %v1255 = vlaneseq
    %v1256 = vshrl.u32 %v1255, 7
    %v1257 = vsub.s32 0, %v1256
    %v1258 = vrot.slane %v1238, %v1257
    %v1259 = vmul.f32 %v1241, %v1258
    %v1260 = vmul.f32 %v1245, %v1258
    %v1261 = vmul.f32 %v1249, %v1258
    %v1262 = vmul.f32 %v1253, %v1258
    %v1263 = vadd.f32 %v1234, %v1259
    %v1264 = vadd.f32 %v1235, %v1260
    %v1265 = vadd.f32 %v1236, %v1261
    %v1266 = vadd.f32 %v1237, %v1262
    %v1267 = vld [vmem:[%s0 + $0x2] sm:$0x1]
    %1268 = vset.pattern.permute.xlu0 2
    %1269 = vperm.xlu0 %1268, %v1205
    %v1270 = vpop.permute.xlu0 %1269
    %1272 = vset.pattern.permute.xlu0 2
    %1273 = vperm.xlu0 %1272, %v1206
    %v1274 = vpop.permute.xlu0 %1273
    %1276 = vset.pattern.permute.xlu0 2
    %1277 = vperm.xlu0 %1276, %v1207
    %v1278 = vpop.permute.xlu0 %1277
    %1280 = vset.pattern.permute.xlu0 2
    %1281 = vperm.xlu0 %1280, %v1208
    %v1282 = vpop.permute.xlu0 %1281
    %v1284 = vlaneseq
    %v1285 = vshrl.u32 %v1284, 7
    %v1286 = vsub.s32 0, %v1285
    %v1287 = vrot.slane %v1267, %v1286
    %v1288 = vmul.f32 %v1270, %v1287
    %v1289 = vmul.f32 %v1274, %v1287
    %v1290 = vmul.f32 %v1278, %v1287
    %v1291 = vmul.f32 %v1282, %v1287
    %v1292 = vadd.f32 %v1263, %v1288
    %v1293 = vadd.f32 %v1264, %v1289
    %v1294 = vadd.f32 %v1265, %v1290
    %v1295 = vadd.f32 %v1266, %v1291
    %v1296 = vld [vmem:[#allocation2 + $0xe0] sm:$0xff]
    %v1297 = vld [vmem:[#allocation2 + $0xe8] sm:$0xff]
    %v1298 = vld [vmem:[#allocation2 + $0xf0] sm:$0xff]
    %v1299 = vld [vmem:[#allocation2 + $0xf8] sm:$0xff]
    %v1300 = vpack.c.bf16 %v1297, %v1296
    %v1301 = vpack.c.bf16 %v1299, %v1298
    %v1302 = vpack.c.bf16 %v1190, %v1189
    %v1303 = vpack.c.bf16 %v1192, %v1191
    %v1304 = vpack.c.bf16 %v1194, %v1193
    %v1305 = vpack.c.bf16 %v1196, %v1195
    %v1306 = vpack.c.bf16 %v1198, %v1197
    %v1307 = vpack.c.bf16 %v1200, %v1199
    %v1308 = vpack.c.bf16 %v1202, %v1201
    %v1309 = vpack.c.bf16 %v1204, %v1203
    %1310 = vmatprep.subr.bf16.mxu0 0
    %1311 = vmatpush1.bf16.msra.mxu0 %v1302
    %1312 = vmatprep.subr.bf16.mxu0 0
    %1313 = vmatpush1.bf16.msra.mxu0 %v1303
    %1314 = vmatprep.subr.bf16.mxu0 0
    %1315 = vmatpush1.bf16.msra.mxu0 %v1304
    %1316 = vmatprep.subr.bf16.mxu0 0
    %1317 = vmatpush1.bf16.msra.mxu0 %v1305
    %1318 = vmatprep.subr.bf16.mxu0 0
    %1319 = vmatpush1.bf16.msra.mxu0 %v1306
    %1320 = vmatprep.subr.bf16.mxu0 0
    %1321 = vmatpush1.bf16.msra.mxu0 %v1307
    %1322 = vmatprep.subr.bf16.mxu0 0
    %1323 = vmatpush1.bf16.msra.mxu0 %v1308
    %1324 = vmatprep.subr.bf16.mxu0 0
    %1325 = vmatpush1.bf16.msra.mxu0 %v1309
    %1326 = vmatprep.subr.bf16.mxu0 0
    %1327 = vmatpush1.bf16.msra.mxu0 0
    %1328 = vmatprep.subr.bf16.mxu0 0
    %1329 = vmatpush1.bf16.msra.mxu0 0
    %1330 = vmatprep.subr.bf16.mxu0 0
    %1331 = vmatpush1.bf16.msra.mxu0 0
    %1332 = vmatprep.subr.bf16.mxu0 0
    %1333 = vmatpush1.bf16.msra.mxu0 0
    %1334 = vmatprep.subr.bf16.mxu0 0
    %1335 = vmatpush1.bf16.msra.mxu0 0
    %1336 = vmatprep.subr.bf16.mxu0 0
    %1337 = vmatpush1.bf16.msra.mxu0 0
    %1338 = vmatprep.subr.bf16.mxu0 0
    %1339 = vmatpush1.bf16.msra.mxu0 0
    %1340 = vmatprep.subr.bf16.mxu0 0
    %1341 = vmatpush1.bf16.msra.mxu0 0
    %1342 = vmatprep.mubr.bf16.mxu0 0
    %1343 = vmatmul.mubr.bf16.gmra.mrb[0].mxu0 %v1300
    %v1344 = vpop.f32.mrb[0].mxu0
    %v1345 = vadd.f32 0.0, %v1344
    %v1346 = vpop.f32.mrb[0].mxu0
    %v1347 = vpop.f32.mrb[0].mxu0
    %v1348 = vadd.f32 0.0, %v1347
    %v1349 = vpop.f32.mrb[0].mxu0
    %1350 = vmatprep.mubr.bf16.mxu0 0
    %1351 = vmatmul.mubr.bf16.gmra.mrb[0].mxu0 %v1301
    %v1352 = vpop.f32.mrb[0].mxu0
    %v1353 = vadd.f32 0.0, %v1352
    %v1354 = vpop.f32.mrb[0].mxu0
    %v1355 = vpop.f32.mrb[0].mxu0
    %v1356 = vadd.f32 0.0, %v1355
    %v1357 = vpop.f32.mrb[0].mxu0
    %1358 = vdwg.mxu0
    %v1359 = vadd.f32 %v1292, %v1345
    %v1360 = vadd.f32 %v1293, %v1348
    %v1361 = vadd.f32 %v1294, %v1353
    %v1362 = vadd.f32 %v1295, %v1356
    %1363 = vset.pattern.permute.xlu0 4
    %1364 = vperm.xlu0 %1363, %v1205
    %v1365 = vpop.permute.xlu0 %1364
    %1367 = vset.pattern.permute.xlu0 4
    %1368 = vperm.xlu0 %1367, %v1206
    %v1369 = vpop.permute.xlu0 %1368
    %1371 = vset.pattern.permute.xlu0 4
    %1372 = vperm.xlu0 %1371, %v1207
    %v1373 = vpop.permute.xlu0 %1372
    %1375 = vset.pattern.permute.xlu0 4
    %1376 = vperm.xlu0 %1375, %v1208
    %v1377 = vpop.permute.xlu0 %1376
    %v1379 = vadd.f32 %v1359, %v1365
    %v1380 = vadd.f32 %v1360, %v1369
    %v1381 = vadd.f32 %v1361, %v1373
    %v1382 = vadd.f32 %v1362, %v1377
    %v1383 = vmax.f32 %v1379, 0.0
    %v1384 = vmax.f32 %v1380, 0.0
    %v1385 = vmax.f32 %v1381, 0.0
    %v1386 = vmax.f32 %v1382, 0.0
    %v1387 = vld [vmem:[#allocation2 + $0x100] sm:$0xff]
    %v1388 = vld [vmem:[#allocation2 + $0x108] sm:$0xff]
    %v1389 = vld [vmem:[#allocation2 + $0x110] sm:$0xff]
    %v1390 = vld [vmem:[#allocation2 + $0x118] sm:$0xff]
    %v1391 = vpack.c.bf16 %v1388, %v1387
    %v1392 = vpack.c.bf16 %v1390, %v1389
    %v1393 = vpack.c.bf16 %v1384, %v1383
    %v1394 = vpack.c.bf16 %v1386, %v1385
    %1396 = vset.pattern.permute.xlu0 32
    %1397 = vperm.xlu0 %1396, %v1387
    %v1398 = vpop.permute.xlu0 %1397
    %1401 = vset.pattern.permute.xlu0 32
    %1402 = vperm.xlu0 %1401, %v1388
    %v1403 = vpop.permute.xlu0 %1402
    %1406 = vset.pattern.permute.xlu0 32
    %1407 = vperm.xlu0 %1406, %v1389
    %v1408 = vpop.permute.xlu0 %1407
    %1411 = vset.pattern.permute.xlu0 32
    %1412 = vperm.xlu0 %1411, %v1390
    %v1413 = vpop.permute.xlu0 %1412
    %vm1415 = vcmask 261120
    %v1417 = vsel %vm1415, %v1391, 0
    %v1420 = vsel %vm1415, %v1392, 0
    %1422 = vmatprep.subr.bf16.mxu0 0
    %1423 = vmatpush1.bf16.msra.mxu0 %v1393
    %1424 = vmatprep.subr.bf16.mxu0 0
    %1425 = vmatpush1.bf16.msra.mxu0 %v1394
    %1426 = vmatprep.subr.bf16.mxu0 0
    %1427 = vmatpush1.bf16.msra.mxu0 0
    %1428 = vmatprep.subr.bf16.mxu0 0
    %1429 = vmatpush1.bf16.msra.mxu0 0
    %1430 = vmatprep.subr.bf16.mxu0 0
    %1431 = vmatpush1.bf16.msra.mxu0 0
    %1432 = vmatprep.subr.bf16.mxu0 0
    %1433 = vmatpush1.bf16.msra.mxu0 0
    %1434 = vmatprep.subr.bf16.mxu0 0
    %1435 = vmatpush1.bf16.msra.mxu0 0
    %1436 = vmatprep.subr.bf16.mxu0 0
    %1437 = vmatpush1.bf16.msra.mxu0 0
    %1438 = vmatprep.subr.bf16.mxu0 0
    %1439 = vmatpush1.bf16.msra.mxu0 0
    %1440 = vmatprep.subr.bf16.mxu0 0
    %1441 = vmatpush1.bf16.msra.mxu0 0
    %1442 = vmatprep.subr.bf16.mxu0 0
    %1443 = vmatpush1.bf16.msra.mxu0 0
    %1444 = vmatprep.subr.bf16.mxu0 0
    %1445 = vmatpush1.bf16.msra.mxu0 0
    %1446 = vmatprep.subr.bf16.mxu0 0
    %1447 = vmatpush1.bf16.msra.mxu0 0
    %1448 = vmatprep.subr.bf16.mxu0 0
    %1449 = vmatpush1.bf16.msra.mxu0 0
    %1450 = vmatprep.subr.bf16.mxu0 0
    %1451 = vmatpush1.bf16.msra.mxu0 0
    %1452 = vmatprep.subr.bf16.mxu0 0
    %1453 = vmatpush1.bf16.msra.mxu0 0
    %1454 = vmatprep.mubr.bf16.mxu0 0
    %1455 = vmatmul.mubr.bf16.gmra.mrb[0].mxu0 %v1417
    %v1456 = vpop.f32.mrb[0].mxu0
    %v1457 = vadd.f32 %v1398, %v1456
    %v1458 = vpop.f32.mrb[0].mxu0
    %v1459 = vpop.f32.mrb[0].mxu0
    %v1460 = vadd.f32 %v1403, %v1459
    %v1461 = vpop.f32.mrb[0].mxu0
    %1462 = vmatprep.mubr.bf16.mxu0 0
    %1463 = vmatmul.mubr.bf16.gmra.mrb[0].mxu0 %v1420
    %v1464 = vpop.f32.mrb[0].mxu0
    %v1465 = vadd.f32 %v1408, %v1464
    %v1466 = vpop.f32.mrb[0].mxu0
    %v1467 = vpop.f32.mrb[0].mxu0
    %v1468 = vadd.f32 %v1413, %v1467
    %v1469 = vpop.f32.mrb[0].mxu0
    %1470 = vdwg.mxu0
    %v1471 = vmax.f32 %v1457, 0.0
    %v1472 = vmax.f32 %v1460, 0.0
    %v1473 = vmax.f32 %v1465, 0.0
    %v1474 = vmax.f32 %v1468, 0.0
    %v1475 = vld [vmem:[#allocation2 + $0x120] sm:$0xff]
    %v1476 = vpack.c.bf16 %v1475, %v1475
    %v1477 = vpack.c.bf16 %v1472, %v1471
    %v1478 = vpack.c.bf16 %v1474, %v1473
    %1480 = vset.pattern.permute.xlu0 32
    %1481 = vperm.xlu0 %1480, %v1475
    %v1482 = vpop.permute.xlu0 %1481
    %v1485 = vsel %vm1415, %v1476, 0
    %1487 = vmatprep.subr.bf16.mxu0 0
    %1488 = vmatpush1.bf16.msra.mxu0 %v1477
    %1489 = vmatprep.subr.bf16.mxu0 0
    %1490 = vmatpush1.bf16.msra.mxu0 %v1478
    %1491 = vmatprep.subr.bf16.mxu0 0
    %1492 = vmatpush1.bf16.msra.mxu0 0
    %1493 = vmatprep.subr.bf16.mxu0 0
    %1494 = vmatpush1.bf16.msra.mxu0 0
    %1495 = vmatprep.subr.bf16.mxu0 0
    %1496 = vmatpush1.bf16.msra.mxu0 0
    %1497 = vmatprep.subr.bf16.mxu0 0
    %1498 = vmatpush1.bf16.msra.mxu0 0
    %1499 = vmatprep.subr.bf16.mxu0 0
    %1500 = vmatpush1.bf16.msra.mxu0 0
    %1501 = vmatprep.subr.bf16.mxu0 0
    %1502 = vmatpush1.bf16.msra.mxu0 0
    %1503 = vmatprep.subr.bf16.mxu0 0
    %1504 = vmatpush1.bf16.msra.mxu0 0
    %1505 = vmatprep.subr.bf16.mxu0 0
    %1506 = vmatpush1.bf16.msra.mxu0 0
    %1507 = vmatprep.subr.bf16.mxu0 0
    %1508 = vmatpush1.bf16.msra.mxu0 0
    %1509 = vmatprep.subr.bf16.mxu0 0
    %1510 = vmatpush1.bf16.msra.mxu0 0
    %1511 = vmatprep.subr.bf16.mxu0 0
    %1512 = vmatpush1.bf16.msra.mxu0 0
    %1513 = vmatprep.subr.bf16.mxu0 0
    %1514 = vmatpush1.bf16.msra.mxu0 0
    %1515 = vmatprep.subr.bf16.mxu0 0
    %1516 = vmatpush1.bf16.msra.mxu0 0
    %1517 = vmatprep.subr.bf16.mxu0 0
    %1518 = vmatpush1.bf16.msra.mxu0 0
    %1519 = vmatprep.mubr.bf16.mxu0 0
    %1520 = vmatmul.mubr.bf16.gmra.mrb[0].mxu0 %v1485
    %v1521 = vpop.f32.mrb[0].mxu0
    %v1522 = vadd.f32 %v1482, %v1521
    %v1523 = vpop.f32.mrb[0].mxu0
    %v1524 = vpop.f32.mrb[0].mxu0
    %v1525 = vpop.f32.mrb[0].mxu0
    %1526 = vdwg.mxu0
    %1527 = vst [vmem:[%s2] sm:$0xff] %v1522
    // Predicated region
    $region14: #{simple_denoiser.1} parent=1 // pred_check
      _
    $region15: #{simple_denoiser.1} parent=1 // pred_check_branch
      %1529 = sbr.rel (0) target = $region17
    $region16: #{simple_denoiser.1} parent=1 // pred_region
      _
    $region17: #{simple_denoiser.1} parent=1 // pred_fallthru
      _
    // Predicated region
    $region18: #{simple_denoiser.1} parent=1 // pred_check
      _
    $region19: #{simple_denoiser.1} parent=1 // pred_check_branch
      %1531 = sbr.rel (0) target = $region21
    $region20: #{simple_denoiser.1} parent=1 // pred_region
      _
    $region21: #{simple_denoiser.1} parent=1 // pred_fallthru
      _
    %1532 = vsyncpa [#allocation3], 1

</llo_original>
